<compile_context>
chip_gen: v6e
topology: v6e:2x2x1
jax: 0.10.0
libtpu: 0.0.40
codegen_flags: <defaults>
</compile_context>

<pallas_src>
import jax
import jax.numpy as jnp
from jax import lax
from jax.experimental import pallas as pl
from jax.experimental.pallas import tpu as pltpu

D_IN, D_HID = 128, 256
N_CTR, N_REG, N_CLS = 1, 8, 10
N_EXP = 6                          # reg channels 0..5 get exp()
D_HEADS = N_CTR + N_REG + N_CLS    # 19 real output channels
D_W_PAD = 128                      # lane-dense resident fused-weight width


def _ca_head_kernel(feat_ref, w_ref, b_ref, out_ref):
    # One MXU GEMM per tile: (tn, 128) @ (128, 128), f32 accumulation.
    y = jnp.dot(feat_ref[...], w_ref[...],
                preferred_element_type=jnp.float32,
                precision=lax.Precision.HIGHEST)
    y = y + b_ref[...]                                  # f32 bias add (VPU)
    # Store only the 19 real head channels (narrow masked store; the 6.7x
    # fewer writeback bytes dominate on this HBM-bound kernel).
    out_ref[...] = y[:, :D_HEADS].astype(out_ref.dtype)


def _fuse_params(params, compute_dtype):
    """Pre-compose upsample_layer with the three heads (exact: CAHead.forward
    has no activation/BN between them) and pack into one lane-dense weight."""
    (w_up, b_up, w_ctr, b_ctr, w_reg, b_reg, w_cls, b_cls) = params
    w_heads = jnp.concatenate([w_ctr, w_reg, w_cls], axis=1)            # (256, 19)
    b_heads = jnp.concatenate([b_ctr, b_reg, b_cls], axis=1)            # (1, 19)
    w_fused = jnp.dot(w_up, w_heads, precision=lax.Precision.HIGHEST)   # (128, 19)
    b_fused = jnp.dot(b_up, w_heads, precision=lax.Precision.HIGHEST) + b_heads
    pad = D_W_PAD - D_HEADS
    w_fused = jnp.pad(w_fused, ((0, 0), (0, pad)))                      # (128, 128)
    b_fused = jnp.pad(b_fused, ((0, 0), (0, pad)))                      # (1, 128)
    return w_fused.astype(compute_dtype), b_fused.astype(jnp.float32)


def _round_up(x, m):
    return (x + m - 1) // m * m


def _choose_tn(n, tn_max=1024, target_steps=8):
    """Sublane-aligned point tile giving >= ~target_steps grid steps (so each
    v7x TensorCore gets several pipelined steps), capped at tn_max."""
    tn = _round_up(pl.cdiv(n, target_steps), 8)
    tn = max(128, min(tn, tn_max))
    tn = min(tn, _round_up(n, 8))      # never larger than the (8-aligned) point count
    return max(8, tn)


def ca_head_forward(select_points, params, *, tn=None):
    """Pallas implementation of CAHead.forward (no image fusion path).

    Pass bf16 `features` for the perf mode on ANY generation (v5e included):
    the MXU takes bf16 natively; accumulation, bias add and exp stay in f32.
    """
    points, features, sort_inds = select_points
    del points, sort_inds      # unused by the non-fusion forward compute path
    n = features.shape[0]
    assert features.shape[1] == D_IN

    w_fused, b_fused = _fuse_params(params, compute_dtype=features.dtype)
    if tn is None:
        tn = _choose_tn(n)

    grid_spec = pl.GridSpec(
        grid=(pl.cdiv(n, tn),),            # ragged last block handled by Pallas
        in_specs=[
            pl.BlockSpec((tn, D_IN), lambda i: (i, 0)),         # streaming tile
            pl.BlockSpec((D_IN, D_W_PAD), lambda i: (0, 0)),    # resident weight
            pl.BlockSpec((1, D_W_PAD), lambda i: (0, 0)),       # resident bias
        ],
        out_specs=pl.BlockSpec((tn, D_HEADS), lambda i: (i, 0)),
    )

    packed = pl.pallas_call(
        _ca_head_kernel,
        out_shape=jax.ShapeDtypeStruct((n, D_HEADS), jnp.float32),
        grid_spec=grid_spec,
        compiler_params=pltpu.CompilerParams(
            dimension_semantics=("parallel",)),
    )(features, w_fused, b_fused)

    centerness = packed[:, :N_CTR]
    reg = packed[:, N_CTR:N_CTR + N_REG]
    cls_scores = packed[:, N_CTR + N_REG:]
    # exp only on the 6 distance channels, fused by XLA with the slice above.
    bbox_pred = jnp.concatenate([jnp.exp(reg[:, :N_EXP]), reg[:, N_EXP:]],
                                axis=1)
    return centerness, bbox_pred, cls_scores


def init_params(key):
    """Deterministic synthetic weights matching CAHead.__init__ shapes.

    PyTorch stores Linear weight as (out, in); we keep the transposed (in, out)
    layout so y = x @ W + b.  Biases are (1, out).
    """
    ks = jax.random.split(key, 8)

    def lin(kw, kb, fan_in, fan_out):
        scale = 1.0 / jnp.sqrt(fan_in)
        w = jax.random.uniform(kw, (fan_in, fan_out), jnp.float32, -scale, scale)
        b = jax.random.uniform(kb, (1, fan_out), jnp.float32, -scale, scale)
        return w, b

    w_up, b_up = lin(ks[0], ks[1], D_IN, D_HID)      # upsample_layer: Linear(128, 256)
    w_ctr, b_ctr = lin(ks[2], ks[3], D_HID, N_CTR)   # centerness:     Linear(256, 1)
    w_reg, b_reg = lin(ks[4], ks[5], D_HID, N_REG)   # reg:            Linear(256, 8)
    w_cls, b_cls = lin(ks[6], ks[7], D_HID, N_CLS)   # cls:            Linear(256, 10)
    return (w_up, b_up, w_ctr, b_ctr, w_reg, b_reg, w_cls, b_cls)


def _reference_forward(features, params):
    """Pure-JAX reference mirroring the PyTorch forward (no fusion), full f32."""
    (w_up, b_up, w_ctr, b_ctr, w_reg, b_reg, w_cls, b_cls) = params
    hi = lax.Precision.HIGHEST
    h = jnp.dot(features, w_up, precision=hi) + b_up
    ctr = jnp.dot(h, w_ctr, precision=hi) + b_ctr
    cls = jnp.dot(h, w_cls, precision=hi) + b_cls
    reg = jnp.dot(h, w_reg, precision=hi) + b_reg
    bbox = jnp.concatenate([jnp.exp(reg[:, :N_EXP]), reg[:, N_EXP:]], axis=1)
    return ctr, bbox, cls


# TODO(synk): the img_dict/fusion_layer branch (external fusion module) and the
# loss()/get_bboxes()/_bbox_pred_to_bbox() heads are host-side training /
# post-processing logic, not ported to Pallas.

if __name__ == "__main__":
    key = jax.random.PRNGKey(0)
    k_feat, k_pts, k_param = jax.random.split(key, 3)

    # Deliberately NOT a multiple of the tile size: exercises the ragged last
    # grid block (no host-side padding / post-kernel copy).  Auto tn=256 ->
    # grid=(8,), i.e. >=4 pipelined steps per v7x TensorCore.
    N = 2000
    features = jax.random.normal(k_feat, (N, D_IN), jnp.float32)
    points = jax.random.normal(k_pts, (N, 3), jnp.float32)
    sort_inds = jnp.arange(N, dtype=jnp.int32)
    params = init_params(k_param)

    ref_ctr, ref_bbox, ref_cls = _reference_forward(features, params)

    # f32 path: matches the PyTorch module's numerics.
    centerness, bbox_pred, cls_scores = ca_head_forward(
        (points, features, sort_inds), params)
    jax.block_until_ready((centerness, bbox_pred, cls_scores))

    assert centerness.shape == (N, N_CTR)
    assert bbox_pred.shape == (N, N_REG)
    assert cls_scores.shape == (N, N_CLS)
    assert jnp.allclose(centerness, ref_ctr, atol=2e-4, rtol=2e-4)
    assert jnp.allclose(bbox_pred, ref_bbox, atol=2e-4, rtol=2e-4)
    assert jnp.allclose(cls_scores, ref_cls, atol=2e-4, rtol=2e-4)

    # bf16-input perf mode (valid on v5e/v6e/v7x): half the feature DMA bytes,
    # bf16 MXU, still f32 accumulation + f32 bias/exp.
    ctr_bf, bbox_bf, cls_bf = ca_head_forward(
        (points, features.astype(jnp.bfloat16), sort_inds), params)
    jax.block_until_ready((ctr_bf, bbox_bf, cls_bf))
    assert jnp.allclose(ctr_bf, ref_ctr, atol=5e-2, rtol=5e-2)
    assert jnp.allclose(bbox_bf, ref_bbox, atol=5e-2, rtol=5e-2)
    assert jnp.allclose(cls_bf, ref_cls, atol=5e-2, rtol=5e-2)

    print("KERNEL_OK")
</pallas_src>

<mosaic_0001>
module attributes {stable_mosaic.version = 11 : i64} {
  func.func @_ca_head_kernel(%arg0: i32, %arg1: memref<256x128xf32, #tpu.memory_space<vmem>>, %arg2: memref<128x128xf32, #tpu.memory_space<vmem>>, %arg3: memref<1x128xf32, #tpu.memory_space<vmem>>, %arg4: memref<256x19xf32, #tpu.memory_space<vmem>>) attributes {dimension_semantics = [#tpu.dimension_semantics<parallel>], iteration_bounds = array<i64: 8>, scalar_prefetch = 0 : i64, scratch_operands = 0 : i64, tpu.core_type = #tpu.core_type<tc>, window_params = [{transform_indices = @transform_0, window_bounds = array<i64: 256, 128>}, {pipeline_mode = #tpu.pipeline_mode<synchronous>, transform_indices = @transform_1, window_bounds = array<i64: 128, 128>}, {pipeline_mode = #tpu.pipeline_mode<synchronous>, transform_indices = @transform_2, window_bounds = array<i64: 1, 128>}, {transform_indices = @transform_3, window_bounds = array<i64: 256, 19>}]} {
    %c0 = arith.constant 0 : index
    %c0_0 = arith.constant 0 : index
    %0 = vector.load %arg1[%c0, %c0_0] : memref<256x128xf32, #tpu.memory_space<vmem>>, vector<256x128xf32>
    %c0_1 = arith.constant 0 : index
    %c0_2 = arith.constant 0 : index
    %1 = vector.load %arg2[%c0_1, %c0_2] : memref<128x128xf32, #tpu.memory_space<vmem>>, vector<128x128xf32>
    %cst = arith.constant dense<0.000000e+00> : vector<256x128xf32>
    %2 = tpu.matmul %0, %1, %cst {dimension_numbers = #tpu.dot_dimension_numbers<[1], [0], [0], [1], [0, 0, 1, 1], [], []>, precision = #tpu.contract_precision<fp32>} : vector<256x128xf32>, vector<128x128xf32>, vector<256x128xf32> -> vector<256x128xf32>
    %c0_3 = arith.constant 0 : index
    %c0_4 = arith.constant 0 : index
    %3 = vector.load %arg3[%c0_3, %c0_4] : memref<1x128xf32, #tpu.memory_space<vmem>>, vector<1x128xf32>
    %4 = vector.broadcast %3 : vector<1x128xf32> to vector<256x128xf32>
    %5 = arith.addf %2, %4 : vector<256x128xf32>
    %6 = vector.extract_strided_slice %5 {offsets = [0, 0], sizes = [256, 19], strides = [1, 1]} : vector<256x128xf32> to vector<256x19xf32>
    %c0_5 = arith.constant 0 : index
    %c0_6 = arith.constant 0 : index
    %7 = vector.load %arg4[%c0_5, %c0_6] : memref<256x19xf32, #tpu.memory_space<vmem>>, vector<256x19xf32>
    tpu.vector_store %arg4[%c0_5, %c0_6], %6 {strides = array<i32>} : memref<256x19xf32, #tpu.memory_space<vmem>>, vector<256x19xf32>,
    return
  }
  func.func @transform_0(%arg0: i32) -> (i32, i32) {
    %c0_i32 = arith.constant 0 : i32
    %c0_i32_0 = arith.constant 0 : i32
    return %arg0, %c0_i32 : i32, i32
  }
  func.func @transform_1(%arg0: i32) -> (i32, i32) {
    %c0_i32 = arith.constant 0 : i32
    %c0_i32_0 = arith.constant 0 : i32
    %c0_i32_1 = arith.constant 0 : i32
    return %c0_i32, %c0_i32_0 : i32, i32
  }
  func.func @transform_2(%arg0: i32) -> (i32, i32) {
    %c0_i32 = arith.constant 0 : i32
    %c0_i32_0 = arith.constant 0 : i32
    %c0_i32_1 = arith.constant 0 : i32
    return %c0_i32, %c0_i32_0 : i32, i32
  }
  func.func @transform_3(%arg0: i32) -> (i32, i32) {
    %c0_i32 = arith.constant 0 : i32
    %c0_i32_0 = arith.constant 0 : i32
    return %arg0, %c0_i32 : i32, i32
  }
}

</mosaic_0001>

<llo_original>
// kernel: tpu_custom_call.1
$region0: #{tpu_custom_call.1}
  #allocation0 [shape = 'u32[]', space=smem, size = 0x4, offset = 0x4, fixed_abs, tag = 'smem constant byte address 0x4 - core index']
  #allocation1 [shape = 'u32[144,128]{1,0:T(1,128)}', space=vmem, size = 0x12000, scoped, tag = 'internal scratch']
  %s0 = inlined_call_operand.hbm [shape: f32[2000,128], index: 0, kind: input, shape index: {}]
  %s1 = inlined_call_operand.hbm [shape: f32[128,128], index: 1, kind: input, shape index: {}]
  %s2 = inlined_call_operand.vmem [shape: f32[1,128], index: 2, kind: input, shape index: {}]
  %s3 = inlined_call_operand.vmem [shape: f32[2000,19], index: 3, kind: output, shape index: {}]
  %s4 = sld [smem:[#allocation0]]
  $region101: #{tpu_custom_call.1} parent=0
    _
  %s6 = ssub.s32 1, %s4
  %s7 = scalar_select 0, %s6, %s4
  $region1: #{tpu_custom_call.1} parent=0
    #allocation2 [shape = 'u8[262144]{0}', space=vmem, size = 0x40000, scoped, tag = 'input window, operand 0']
    #allocation3 [shape = 's32[2]{0}', space=sflag, size = 0x8, scoped, tag = 'scoped memory for tpu_custom_call.1']
    #allocation4 [shape = 'u8[65536]{0}', space=vmem, size = 0x10000, scoped, tag = 'input window, operand 1, single buffered']
    #allocation5 [shape = 's32[1]{0}', space=sflag, size = 0x4, scoped, tag = 'scoped memory for tpu_custom_call.1']
    #allocation6 [shape = 'u8[262144]{0}', space=vmem, size = 0x40000, scoped, tag = 'output window, operand 0']
    %8 = vsyncpa [#allocation3], 0
    %s9 = scalar_lea.sflag [#allocation3], 1
    %10 = vsyncpa %s9, 0
    %11 = vsyncpa [#allocation5], 0
    loop: start=0, step=1, limit=10
    $region2: #{tpu_custom_call.1} parent=1 // loop_pre_header
      _
    $region3: #{tpu_custom_call.1} parent=1 // loop_header
      %s13 = sphi 0, %s17
      %p14 = scmp.ge.s32.totalorder %s13, 10
      %s23 = sphi 0, %s25
      %s26 = sphi 0, %s23
      %s27 = sphi 0, %s26
      %s43 = sphi 0, %s27
      %s47 = sphi 0, %s47
      %s49 = sphi 0, %s47
      %s50 = sphi 0, %s49
      %s64 = sphi 0, %s50
      %s68 = sphi 0, %s68
      %s70 = sphi 0, %s68
      %s71 = sphi 0, %s70
      %s85 = sphi 0, %s71
      %s91 = sphi 0, %s93
      %s94 = sphi 0, %s91
      %s95 = sphi 0, %s94
      %s111 = sphi 0, %s95
    $region4: #{tpu_custom_call.1} parent=1 // loop_header_branch
      %16 = sbr.rel (%p14) target = $region8
    $region5: #{tpu_custom_call.1} parent=1 // loop_body
      %s18 = ssub.s32 %s13, 1
      %s19 = ssub.s32 %s13, 2
      %s20 = sadd.s32 %s13, 1
      %s21 = ssub.s32 %s13, %s20
      %p22 = scmp.eq.s32.totalorder %s21, 0
      %s24 = sadd.s32 %s23, 1
      %s25 = scalar_select %p22, %s23, %s24
      %p28 = pneg %p22
      %p29 = scmp.eq.s32.totalorder %s13, 7
      %p30 = por %p28, %p29
      %p31 = scmp.ne.s32.totalorder %s23, %s26
      %p32 = scmp.eq.s32.totalorder %s13, 0
      %p33 = por %p31, %p32
      %p34 = scmp.ne.s32.totalorder %s23, %s26
      %p35 = scmp.eq.s32.totalorder %s18, 7
      %p36 = por %p34, %p35
      %p37 = scmp.ne.s32.totalorder %s26, %s27
      %p38 = scmp.eq.s32.totalorder %s18, 0
      %p39 = por %p37, %p38
      %p40 = scmp.ne.s32.totalorder %s26, %s27
      %p41 = scmp.eq.s32.totalorder %s19, 7
      %p42 = por %p40, %p41
      %p44 = scmp.ne.s32.totalorder %s27, %s43
      %p45 = scmp.eq.s32.totalorder %s19, 0
      %p46 = por %p44, %p45
      %s48 = sadd.s32 %s47, 1
      %p51 = scmp.eq.s32.totalorder %s13, 7
      %p52 = scmp.ne.s32.totalorder %s47, %s49
      %p53 = scmp.eq.s32.totalorder %s13, 0
      %p54 = por %p52, %p53
      %p55 = scmp.ne.s32.totalorder %s47, %s49
      %p56 = scmp.eq.s32.totalorder %s18, 7
      %p57 = por %p55, %p56
      %p58 = scmp.ne.s32.totalorder %s49, %s50
      %p59 = scmp.eq.s32.totalorder %s18, 0
      %p60 = por %p58, %p59
      %p61 = scmp.ne.s32.totalorder %s49, %s50
      %p62 = scmp.eq.s32.totalorder %s19, 7
      %p63 = por %p61, %p62
      %p65 = scmp.ne.s32.totalorder %s50, %s64
      %p66 = scmp.eq.s32.totalorder %s19, 0
      %p67 = por %p65, %p66
      %s69 = sadd.s32 %s68, 1
      %p72 = scmp.eq.s32.totalorder %s13, 7
      %p73 = scmp.ne.s32.totalorder %s68, %s70
      %p74 = scmp.eq.s32.totalorder %s13, 0
      %p75 = por %p73, %p74
      %p76 = scmp.ne.s32.totalorder %s68, %s70
      %p77 = scmp.eq.s32.totalorder %s18, 7
      %p78 = por %p76, %p77
      %p79 = scmp.ne.s32.totalorder %s70, %s71
      %p80 = scmp.eq.s32.totalorder %s18, 0
      %p81 = por %p79, %p80
      %p82 = scmp.ne.s32.totalorder %s70, %s71
      %p83 = scmp.eq.s32.totalorder %s19, 7
      %p84 = por %p82, %p83
      %p86 = scmp.ne.s32.totalorder %s71, %s85
      %p87 = scmp.eq.s32.totalorder %s19, 0
      %p88 = por %p86, %p87
      %s89 = ssub.s32 %s13, %s20
      %p90 = scmp.eq.s32.totalorder %s89, 0
      %s92 = sadd.s32 %s91, 1
      %s93 = scalar_select %p90, %s91, %s92
      %p96 = pneg %p90
      %p97 = scmp.eq.s32.totalorder %s13, 7
      %p98 = por %p96, %p97
      %p99 = scmp.ne.s32.totalorder %s91, %s94
      %p100 = scmp.eq.s32.totalorder %s13, 0
      %p101 = por %p99, %p100
      %p102 = scmp.ne.s32.totalorder %s91, %s94
      %p103 = scmp.eq.s32.totalorder %s18, 7
      %p104 = por %p102, %p103
      %p105 = scmp.ne.s32.totalorder %s94, %s95
      %p106 = scmp.eq.s32.totalorder %s18, 0
      %p107 = por %p105, %p106
      %p108 = scmp.ne.s32.totalorder %s94, %s95
      %p109 = scmp.eq.s32.totalorder %s19, 7
      %p110 = por %p108, %p109
      %p112 = scmp.ne.s32.totalorder %s95, %s111
      %p113 = scmp.eq.s32.totalorder %s19, 0
      %p114 = por %p112, %p113
      %p115 = scmp.le.s32.totalorder 1, %s13
      %p116 = scmp.lt.s32.totalorder %s13, 9
      %p117 = pnand %p115, %p116
      %p118 = pneg %p117
      // Predicated region
      $region9: #{tpu_custom_call.1} parent=5 // pred_check
        _
      $region10: #{tpu_custom_call.1} parent=5 // pred_check_branch
        %120 = sbr.rel (%p117) target = $region12
      $region11: #{tpu_custom_call.1} parent=5 // pred_region
        %s121 = ssub.s32 %s13, 1
        // Predicated region
        $region13: #{tpu_custom_call.1} parent=11 // pred_check
          %p122 = pneg %p60
        $region14: #{tpu_custom_call.1} parent=11 // pred_check_branch
          %124 = sbr.rel (%p122) target = $region16
        $region15: #{tpu_custom_call.1} parent=11 // pred_region
          %s126 = ssub.s32 2048, 2048
          %127 = vsyncadd [#allocation5], %s126
          %s128 = sshll.u32 [#allocation4], 4
          %s129 = int_to_ptr.vmem [resolvable:$true] %s128
          %134 = dma.hbm_to_vmem [thread:$0]  %s1, 2048, %s129, [#allocation5], 128, 128, 8
        $region16: #{tpu_custom_call.1} parent=11 // pred_fallthru
          _
        // Predicated region
        $region17: #{tpu_custom_call.1} parent=11 // pred_check
          %p135 = pneg %p81
        $region18: #{tpu_custom_call.1} parent=11 // pred_check_branch
          %137 = sbr.rel (%p135) target = $region20
        $region19: #{tpu_custom_call.1} parent=11 // pred_region
          _
        $region20: #{tpu_custom_call.1} parent=11 // pred_fallthru
          _
      $region12: #{tpu_custom_call.1} parent=5 // pred_fallthru
        _
      %p138 = scmp.lt.s32.totalorder %s13, 8
      // Predicated region
      $region21: #{tpu_custom_call.1} parent=5 // pred_check
        %p139 = pneg %p138
      $region22: #{tpu_custom_call.1} parent=5 // pred_check_branch
        %141 = sbr.rel (%p139) target = $region24
      $region23: #{tpu_custom_call.1} parent=5 // pred_region
        // Predicated region
        $region25: #{tpu_custom_call.1} parent=23 // pred_check
          %p142 = pneg %p33
        $region26: #{tpu_custom_call.1} parent=23 // pred_check_branch
          %144 = sbr.rel (%p142) target = $region28
        $region27: #{tpu_custom_call.1} parent=23 // pred_region
          %s145 = sand.u32 %s23, 1
          %s146 = scalar_lea.sflag [#allocation3], %s145
          %s147 = sand.u32 %s23, 1
          %s148 = smul.addr %s147, 256
          %s149 = scalar_lea.vmem [#allocation2], %s148
          %s150 = smul.u32 32, %s13
          %s151 = ssub.s32 250, %s150
          %p152 = scmp.lt.s32.totalorder %s151, 32
          %s153 = scalar_select %p152, %s151, 32
          %s154 = smul.u32 128, %s153
          %s156 = ssub.s32 4096, %s154
          %157 = vsyncadd %s146, %s156
          %p158 = scmp.ne.s32.totalorder 0, %s154
          %s159 = smul.addr %s150, 128
          %s160 = scalar_lea.hbm %s0, %s159
          %s161 = smul.u32 8, %s153
          %s162 = sshll.u32 %s149, 4
          %s163 = int_to_ptr.vmem [resolvable:$true] %s162
          %s164 = sshll.u32 %s161, 4
          %168 = dma.hbm_to_vmem [thread:$0]  (%p158), %s160, %s164, %s163, %s146, 128, 128, 8
        $region28: #{tpu_custom_call.1} parent=23 // pred_fallthru
          _
      $region24: #{tpu_custom_call.1} parent=5 // pred_fallthru
        _
      %p169 = scmp.le.s32.totalorder 1, %s13
      %p170 = scmp.lt.s32.totalorder %s13, 9
      %p171 = pnand %p169, %p170
      %p172 = pneg %p171
      // Predicated region
      $region29: #{tpu_custom_call.1} parent=5 // pred_check
        _
      $region30: #{tpu_custom_call.1} parent=5 // pred_check_branch
        %174 = sbr.rel (%p171) target = $region32
      $region31: #{tpu_custom_call.1} parent=5 // pred_region
        %s175 = ssub.s32 %s13, 1
        %s176 = sand.u32 %s26, 1
        %s177 = scalar_lea.sflag [#allocation3], %s176
        %s178 = sand.u32 %s26, 1
        %s179 = smul.addr %s178, 256
        %s180 = scalar_lea.vmem [#allocation2], %s179
        // Predicated region
        $region33: #{tpu_custom_call.1} parent=31 // pred_check
          %p181 = pneg %p39
        $region34: #{tpu_custom_call.1} parent=31 // pred_check_branch
          %183 = sbr.rel (%p181) target = $region36
        $region35: #{tpu_custom_call.1} parent=31 // pred_region
          %184 = dma.done %s177, 4096
        $region36: #{tpu_custom_call.1} parent=31 // pred_fallthru
          _
        // Predicated region
        $region37: #{tpu_custom_call.1} parent=31 // pred_check
          %p185 = pneg %p60
        $region38: #{tpu_custom_call.1} parent=31 // pred_check_branch
          %187 = sbr.rel (%p185) target = $region40
        $region39: #{tpu_custom_call.1} parent=31 // pred_region
          %188 = dma.done [#allocation5], 2048
        $region40: #{tpu_custom_call.1} parent=31 // pred_fallthru
          _
        %s189 = sand.u32 %s26, 1
        %s190 = scalar_lea.sflag [#allocation3], %s189
        %s191 = sand.u32 %s26, 1
        %s192 = smul.addr %s191, 256
        %s193 = scalar_lea.vmem [#allocation2], %s192
        %p194 = pneg %p39
        %p195 = pneg %p36
        %p196 = pneg %p60
        %p197 = pneg %p57
        %p198 = pneg %p81
        %p199 = pneg %p78
        %p200 = pneg %p107
        %p201 = pneg %p104
        %s202 = sand.u32 %s94, 1
        %s203 = sand.u32 %s94, 1
        %s204 = smul.addr %s203, 256
        %s205 = scalar_lea.vmem [#allocation6], %s204
        %s206 = smul.u32 32, %s18
        %s207 = ssub.s32 250, %s206
        %p208 = scmp.lt.s32.totalorder %s207, 32
        %s209 = scalar_select %p208, %s207, 32
        %s210 = smul.u32 128, %s209
        %s211 = smul.u32 32, %s18
        %s212 = ssub.s32 250, %s211
        %p213 = scmp.lt.s32.totalorder %s212, 32
        %s214 = scalar_select %p213, %s212, 32
        %s215 = smul.u32 128, %s214
        %v216 = vld [vmem:[%s180] sm:$0xff]
        %v217 = vld [vmem:[%s180 + $0x8] sm:$0xff]
        %v218 = vld [vmem:[%s180 + $0x10] sm:$0xff]
        %v219 = vld [vmem:[%s180 + $0x18] sm:$0xff]
        %v220 = vld [vmem:[%s180 + $0x20] sm:$0xff]
        %v221 = vld [vmem:[%s180 + $0x28] sm:$0xff]
        %v222 = vld [vmem:[%s180 + $0x30] sm:$0xff]
        %v223 = vld [vmem:[%s180 + $0x38] sm:$0xff]
        %v224 = vld [vmem:[%s180 + $0x40] sm:$0xff]
        %v225 = vld [vmem:[%s180 + $0x48] sm:$0xff]
        %v226 = vld [vmem:[%s180 + $0x50] sm:$0xff]
        %v227 = vld [vmem:[%s180 + $0x58] sm:$0xff]
        %v228 = vld [vmem:[%s180 + $0x60] sm:$0xff]
        %v229 = vld [vmem:[%s180 + $0x68] sm:$0xff]
        %v230 = vld [vmem:[%s180 + $0x70] sm:$0xff]
        %v231 = vld [vmem:[%s180 + $0x78] sm:$0xff]
        %v232 = vld [vmem:[%s180 + $0x80] sm:$0xff]
        %v233 = vld [vmem:[%s180 + $0x88] sm:$0xff]
        %v234 = vld [vmem:[%s180 + $0x90] sm:$0xff]
        %v235 = vld [vmem:[%s180 + $0x98] sm:$0xff]
        %v236 = vld [vmem:[%s180 + $0xa0] sm:$0xff]
        %v237 = vld [vmem:[%s180 + $0xa8] sm:$0xff]
        %v238 = vld [vmem:[%s180 + $0xb0] sm:$0xff]
        %v239 = vld [vmem:[%s180 + $0xb8] sm:$0xff]
        %v240 = vld [vmem:[%s180 + $0xc0] sm:$0xff]
        %v241 = vld [vmem:[%s180 + $0xc8] sm:$0xff]
        %v242 = vld [vmem:[%s180 + $0xd0] sm:$0xff]
        %v243 = vld [vmem:[%s180 + $0xd8] sm:$0xff]
        %v244 = vld [vmem:[%s180 + $0xe0] sm:$0xff]
        %v245 = vld [vmem:[%s180 + $0xe8] sm:$0xff]
        %v246 = vld [vmem:[%s180 + $0xf0] sm:$0xff]
        %v247 = vld [vmem:[%s180 + $0xf8] sm:$0xff]
        %v248 = vld [vmem:[#allocation4] sm:$0xff]
        %v249 = vld [vmem:[#allocation4 + $0x8] sm:$0xff]
        %v250 = vld [vmem:[#allocation4 + $0x10] sm:$0xff]
        %v251 = vld [vmem:[#allocation4 + $0x18] sm:$0xff]
        %v252 = vld [vmem:[#allocation4 + $0x20] sm:$0xff]
        %v253 = vld [vmem:[#allocation4 + $0x28] sm:$0xff]
        %v254 = vld [vmem:[#allocation4 + $0x30] sm:$0xff]
        %v255 = vld [vmem:[#allocation4 + $0x38] sm:$0xff]
        %v256 = vld [vmem:[#allocation4 + $0x40] sm:$0xff]
        %v257 = vld [vmem:[#allocation4 + $0x48] sm:$0xff]
        %v258 = vld [vmem:[#allocation4 + $0x50] sm:$0xff]
        %v259 = vld [vmem:[#allocation4 + $0x58] sm:$0xff]
        %v260 = vld [vmem:[#allocation4 + $0x60] sm:$0xff]
        %v261 = vld [vmem:[#allocation4 + $0x68] sm:$0xff]
        %v262 = vld [vmem:[#allocation4 + $0x70] sm:$0xff]
        %v263 = vld [vmem:[#allocation4 + $0x78] sm:$0xff]
        %v264 = vld [vmem:[%s2] sm:$0x1]
        %v266 = vlaneseq
        %v267 = vshrl.u32 %v266, 7
        %v268 = vsub.s32 0, %v267
        %v269 = vrot.slane %v264, %v268
        %271 = vmatprep.subr.mxu0 0.0
        %v272 = vand.u32 %v263, 4294901760
        %273 = vmatpush1.msra.mxu0 %v272
        %274 = vmatprep.subr.mxu0 0.0
        %v275 = vand.u32 %v262, 4294901760
        %276 = vmatpush1.msra.mxu0 %v275
        %277 = vmatprep.subr.mxu0 0.0
        %v278 = vand.u32 %v261, 4294901760
        %279 = vmatpush1.msra.mxu0 %v278
        %280 = vmatprep.subr.mxu0 0.0
        %v281 = vand.u32 %v260, 4294901760
        %282 = vmatpush1.msra.mxu0 %v281
        %283 = vmatprep.subr.mxu0 0.0
        %v284 = vand.u32 %v259, 4294901760
        %285 = vmatpush1.msra.mxu0 %v284
        %286 = vmatprep.subr.mxu0 0.0
        %v287 = vand.u32 %v258, 4294901760
        %288 = vmatpush1.msra.mxu0 %v287
        %289 = vmatprep.subr.mxu0 0.0
        %v290 = vand.u32 %v257, 4294901760
        %291 = vmatpush1.msra.mxu0 %v290
        %292 = vmatprep.subr.mxu0 0.0
        %v293 = vand.u32 %v256, 4294901760
        %294 = vmatpush1.msra.mxu0 %v293
        %295 = vmatprep.subr.mxu0 0.0
        %v296 = vand.u32 %v255, 4294901760
        %297 = vmatpush1.msra.mxu0 %v296
        %298 = vmatprep.subr.mxu0 0.0
        %v299 = vand.u32 %v254, 4294901760
        %300 = vmatpush1.msra.mxu0 %v299
        %301 = vmatprep.subr.mxu0 0.0
        %v302 = vand.u32 %v253, 4294901760
        %303 = vmatpush1.msra.mxu0 %v302
        %304 = vmatprep.subr.mxu0 0.0
        %v305 = vand.u32 %v252, 4294901760
        %306 = vmatpush1.msra.mxu0 %v305
        %307 = vmatprep.subr.mxu0 0.0
        %v308 = vand.u32 %v251, 4294901760
        %309 = vmatpush1.msra.mxu0 %v308
        %310 = vmatprep.subr.mxu0 0.0
        %v311 = vand.u32 %v250, 4294901760
        %312 = vmatpush1.msra.mxu0 %v311
        %313 = vmatprep.subr.mxu0 0.0
        %v314 = vand.u32 %v249, 4294901760
        %315 = vmatpush1.msra.mxu0 %v314
        %316 = vmatprep.subr.mxu0 0.0
        %v317 = vand.u32 %v248, 4294901760
        %318 = vmatpush1.msra.mxu0 %v317
        %319 = vmatprep.subr.mxu0 0.0
        %320 = vmatpush2.msra.mxu0 0.0
        %321 = vmatprep.subr.mxu0 0.0
        %322 = vmatpush2.msra.mxu0 0.0
        %323 = vmatprep.subr.mxu0 0.0
        %324 = vmatpush2.msra.mxu0 0.0
        %325 = vmatprep.subr.mxu0 0.0
        %326 = vmatpush2.msra.mxu0 0.0
        %327 = vmatprep.subr.mxu0 0.0
        %328 = vmatpush2.msra.mxu0 0.0
        %329 = vmatprep.subr.mxu0 0.0
        %330 = vmatpush2.msra.mxu0 0.0
        %331 = vmatprep.subr.mxu0 0.0
        %332 = vmatpush2.msra.mxu0 0.0
        %333 = vmatprep.subr.mxu0 0.0
        %334 = vmatpush2.msra.mxu0 0.0
        %335 = vmatprep.subr.mxu0 0.0
        %336 = vmatpush2.msra.mxu0 0.0
        %337 = vmatprep.subr.mxu0 0.0
        %338 = vmatpush2.msra.mxu0 0.0
        %339 = vmatprep.subr.mxu0 0.0
        %340 = vmatpush2.msra.mxu0 0.0
        %341 = vmatprep.subr.mxu0 0.0
        %342 = vmatpush2.msra.mxu0 0.0
        %343 = vmatprep.subr.mxu0 0.0
        %344 = vmatpush2.msra.mxu0 0.0
        %345 = vmatprep.subr.mxu0 0.0
        %346 = vmatpush2.msra.mxu0 0.0
        %347 = vmatprep.subr.mxu0 0.0
        %348 = vmatpush2.msra.mxu0 0.0
        %349 = vmatprep.subr.mxu0 0.0
        %350 = vmatpush2.msra.mxu0 0.0
        %351 = vmatprep.mubr.f32.mxu0 0.0
        %v352 = vand.u32 %v216, 4294901760
        %v353 = vsub.f32 %v216, %v352
        %v354 = vand.u32 %v353, 4294901760
        %v355 = vsub.f32 %v353, %v354
        %v356 = vand.u32 %v355, 4294901760
        %357 = vmatmul.mubr.f32.gmra.mxu0 %v356
        %v358 = vpop.f32.mrf.mxu0
        %v359 = vadd.f32 %v269, %v358
        %v360 = vpop.f32.mrf.mxu0
        %361 = vmatprep.mubr.f32.mxu0 0.0
        %v362 = vand.u32 %v217, 4294901760
        %v363 = vsub.f32 %v217, %v362
        %v364 = vand.u32 %v363, 4294901760
        %v365 = vsub.f32 %v363, %v364
        %v366 = vand.u32 %v365, 4294901760
        %367 = vmatmul.mubr.f32.gmra.mxu0 %v366
        %v368 = vpop.f32.mrf.mxu0
        %v369 = vadd.f32 %v269, %v368
        %v370 = vpop.f32.mrf.mxu0
        %371 = vmatprep.mubr.f32.mxu0 0.0
        %v372 = vand.u32 %v218, 4294901760
        %v373 = vsub.f32 %v218, %v372
        %v374 = vand.u32 %v373, 4294901760
        %v375 = vsub.f32 %v373, %v374
        %v376 = vand.u32 %v375, 4294901760
        %377 = vmatmul.mubr.f32.gmra.mxu0 %v376
        %v378 = vpop.f32.mrf.mxu0
        %v379 = vadd.f32 %v269, %v378
        %v380 = vpop.f32.mrf.mxu0
        %381 = vmatprep.mubr.f32.mxu0 0.0
        %v382 = vand.u32 %v219, 4294901760
        %v383 = vsub.f32 %v219, %v382
        %v384 = vand.u32 %v383, 4294901760
        %v385 = vsub.f32 %v383, %v384
        %v386 = vand.u32 %v385, 4294901760
        %387 = vmatmul.mubr.f32.gmra.mxu0 %v386
        %v388 = vpop.f32.mrf.mxu0
        %v389 = vadd.f32 %v269, %v388
        %v390 = vpop.f32.mrf.mxu0
        %391 = vmatprep.mubr.f32.mxu0 0.0
        %v392 = vand.u32 %v220, 4294901760
        %v393 = vsub.f32 %v220, %v392
        %v394 = vand.u32 %v393, 4294901760
        %v395 = vsub.f32 %v393, %v394
        %v396 = vand.u32 %v395, 4294901760
        %397 = vmatmul.mubr.f32.gmra.mxu0 %v396
        %v398 = vpop.f32.mrf.mxu0
        %v399 = vadd.f32 %v269, %v398
        %v400 = vpop.f32.mrf.mxu0
        %401 = vmatprep.mubr.f32.mxu0 0.0
        %v402 = vand.u32 %v221, 4294901760
        %v403 = vsub.f32 %v221, %v402
        %v404 = vand.u32 %v403, 4294901760
        %v405 = vsub.f32 %v403, %v404
        %v406 = vand.u32 %v405, 4294901760
        %407 = vmatmul.mubr.f32.gmra.mxu0 %v406
        %v408 = vpop.f32.mrf.mxu0
        %v409 = vadd.f32 %v269, %v408
        %v410 = vpop.f32.mrf.mxu0
        %411 = vmatprep.mubr.f32.mxu0 0.0
        %v412 = vand.u32 %v222, 4294901760
        %v413 = vsub.f32 %v222, %v412
        %v414 = vand.u32 %v413, 4294901760
        %v415 = vsub.f32 %v413, %v414
        %v416 = vand.u32 %v415, 4294901760
        %417 = vmatmul.mubr.f32.gmra.mxu0 %v416
        %v418 = vpop.f32.mrf.mxu0
        %v419 = vadd.f32 %v269, %v418
        %v420 = vpop.f32.mrf.mxu0
        %421 = vmatprep.mubr.f32.mxu0 0.0
        %v422 = vand.u32 %v223, 4294901760
        %v423 = vsub.f32 %v223, %v422
        %v424 = vand.u32 %v423, 4294901760
        %v425 = vsub.f32 %v423, %v424
        %v426 = vand.u32 %v425, 4294901760
        %427 = vmatmul.mubr.f32.gmra.mxu0 %v426
        %v428 = vpop.f32.mrf.mxu0
        %v429 = vadd.f32 %v269, %v428
        %v430 = vpop.f32.mrf.mxu0
        %431 = vmatprep.mubr.f32.mxu0 0.0
        %v432 = vand.u32 %v224, 4294901760
        %v433 = vsub.f32 %v224, %v432
        %v434 = vand.u32 %v433, 4294901760
        %v435 = vsub.f32 %v433, %v434
        %v436 = vand.u32 %v435, 4294901760
        %437 = vmatmul.mubr.f32.gmra.mxu0 %v436
        %v438 = vpop.f32.mrf.mxu0
        %v439 = vadd.f32 %v269, %v438
        %v440 = vpop.f32.mrf.mxu0
        %441 = vmatprep.mubr.f32.mxu0 0.0
        %v442 = vand.u32 %v225, 4294901760
        %v443 = vsub.f32 %v225, %v442
        %v444 = vand.u32 %v443, 4294901760
        %v445 = vsub.f32 %v443, %v444
        %v446 = vand.u32 %v445, 4294901760
        %447 = vmatmul.mubr.f32.gmra.mxu0 %v446
        %v448 = vpop.f32.mrf.mxu0
        %v449 = vadd.f32 %v269, %v448
        %v450 = vpop.f32.mrf.mxu0
        %451 = vmatprep.mubr.f32.mxu0 0.0
        %v452 = vand.u32 %v226, 4294901760
        %v453 = vsub.f32 %v226, %v452
        %v454 = vand.u32 %v453, 4294901760
        %v455 = vsub.f32 %v453, %v454
        %v456 = vand.u32 %v455, 4294901760
        %457 = vmatmul.mubr.f32.gmra.mxu0 %v456
        %v458 = vpop.f32.mrf.mxu0
        %v459 = vadd.f32 %v269, %v458
        %v460 = vpop.f32.mrf.mxu0
        %461 = vmatprep.mubr.f32.mxu0 0.0
        %v462 = vand.u32 %v227, 4294901760
        %v463 = vsub.f32 %v227, %v462
        %v464 = vand.u32 %v463, 4294901760
        %v465 = vsub.f32 %v463, %v464
        %v466 = vand.u32 %v465, 4294901760
        %467 = vmatmul.mubr.f32.gmra.mxu0 %v466
        %v468 = vpop.f32.mrf.mxu0
        %v469 = vadd.f32 %v269, %v468
        %v470 = vpop.f32.mrf.mxu0
        %471 = vmatprep.mubr.f32.mxu0 0.0
        %v472 = vand.u32 %v228, 4294901760
        %v473 = vsub.f32 %v228, %v472
        %v474 = vand.u32 %v473, 4294901760
        %v475 = vsub.f32 %v473, %v474
        %v476 = vand.u32 %v475, 4294901760
        %477 = vmatmul.mubr.f32.gmra.mxu0 %v476
        %v478 = vpop.f32.mrf.mxu0
        %v479 = vadd.f32 %v269, %v478
        %v480 = vpop.f32.mrf.mxu0
        %481 = vmatprep.mubr.f32.mxu0 0.0
        %v482 = vand.u32 %v229, 4294901760
        %v483 = vsub.f32 %v229, %v482
        %v484 = vand.u32 %v483, 4294901760
        %v485 = vsub.f32 %v483, %v484
        %v486 = vand.u32 %v485, 4294901760
        %487 = vmatmul.mubr.f32.gmra.mxu0 %v486
        %v488 = vpop.f32.mrf.mxu0
        %v489 = vadd.f32 %v269, %v488
        %v490 = vpop.f32.mrf.mxu0
        %491 = vmatprep.mubr.f32.mxu0 0.0
        %v492 = vand.u32 %v230, 4294901760
        %v493 = vsub.f32 %v230, %v492
        %v494 = vand.u32 %v493, 4294901760
        %v495 = vsub.f32 %v493, %v494
        %v496 = vand.u32 %v495, 4294901760
        %497 = vmatmul.mubr.f32.gmra.mxu0 %v496
        %v498 = vpop.f32.mrf.mxu0
        %v499 = vadd.f32 %v269, %v498
        %v500 = vpop.f32.mrf.mxu0
        %501 = vmatprep.mubr.f32.mxu0 0.0
        %v502 = vand.u32 %v231, 4294901760
        %v503 = vsub.f32 %v231, %v502
        %v504 = vand.u32 %v503, 4294901760
        %v505 = vsub.f32 %v503, %v504
        %v506 = vand.u32 %v505, 4294901760
        %507 = vmatmul.mubr.f32.gmra.mxu0 %v506
        %v508 = vpop.f32.mrf.mxu0
        %v509 = vadd.f32 %v269, %v508
        %v510 = vpop.f32.mrf.mxu0
        %511 = vmatprep.mubr.f32.mxu0 0.0
        %v512 = vand.u32 %v232, 4294901760
        %v513 = vsub.f32 %v232, %v512
        %v514 = vand.u32 %v513, 4294901760
        %v515 = vsub.f32 %v513, %v514
        %v516 = vand.u32 %v515, 4294901760
        %517 = vmatmul.mubr.f32.gmra.mxu0 %v516
        %v518 = vpop.f32.mrf.mxu0
        %v519 = vadd.f32 %v269, %v518
        %v520 = vpop.f32.mrf.mxu0
        %521 = vmatprep.mubr.f32.mxu0 0.0
        %v522 = vand.u32 %v233, 4294901760
        %v523 = vsub.f32 %v233, %v522
        %v524 = vand.u32 %v523, 4294901760
        %v525 = vsub.f32 %v523, %v524
        %v526 = vand.u32 %v525, 4294901760
        %527 = vmatmul.mubr.f32.gmra.mxu0 %v526
        %v528 = vpop.f32.mrf.mxu0
        %v529 = vadd.f32 %v269, %v528
        %v530 = vpop.f32.mrf.mxu0
        %531 = vmatprep.mubr.f32.mxu0 0.0
        %v532 = vand.u32 %v234, 4294901760
        %v533 = vsub.f32 %v234, %v532
        %v534 = vand.u32 %v533, 4294901760
        %v535 = vsub.f32 %v533, %v534
        %v536 = vand.u32 %v535, 4294901760
        %537 = vmatmul.mubr.f32.gmra.mxu0 %v536
        %v538 = vpop.f32.mrf.mxu0
        %v539 = vadd.f32 %v269, %v538
        %v540 = vpop.f32.mrf.mxu0
        %541 = vmatprep.mubr.f32.mxu0 0.0
        %v542 = vand.u32 %v235, 4294901760
        %v543 = vsub.f32 %v235, %v542
        %v544 = vand.u32 %v543, 4294901760
        %v545 = vsub.f32 %v543, %v544
        %v546 = vand.u32 %v545, 4294901760
        %547 = vmatmul.mubr.f32.gmra.mxu0 %v546
        %v548 = vpop.f32.mrf.mxu0
        %v549 = vadd.f32 %v269, %v548
        %v550 = vpop.f32.mrf.mxu0
        %551 = vmatprep.mubr.f32.mxu0 0.0
        %v552 = vand.u32 %v236, 4294901760
        %v553 = vsub.f32 %v236, %v552
        %v554 = vand.u32 %v553, 4294901760
        %v555 = vsub.f32 %v553, %v554
        %v556 = vand.u32 %v555, 4294901760
        %557 = vmatmul.mubr.f32.gmra.mxu0 %v556
        %v558 = vpop.f32.mrf.mxu0
        %v559 = vadd.f32 %v269, %v558
        %v560 = vpop.f32.mrf.mxu0
        %561 = vmatprep.mubr.f32.mxu0 0.0
        %v562 = vand.u32 %v237, 4294901760
        %v563 = vsub.f32 %v237, %v562
        %v564 = vand.u32 %v563, 4294901760
        %v565 = vsub.f32 %v563, %v564
        %v566 = vand.u32 %v565, 4294901760
        %567 = vmatmul.mubr.f32.gmra.mxu0 %v566
        %v568 = vpop.f32.mrf.mxu0
        %v569 = vadd.f32 %v269, %v568
        %v570 = vpop.f32.mrf.mxu0
        %571 = vmatprep.mubr.f32.mxu0 0.0
        %v572 = vand.u32 %v238, 4294901760
        %v573 = vsub.f32 %v238, %v572
        %v574 = vand.u32 %v573, 4294901760
        %v575 = vsub.f32 %v573, %v574
        %v576 = vand.u32 %v575, 4294901760
        %577 = vmatmul.mubr.f32.gmra.mxu0 %v576
        %v578 = vpop.f32.mrf.mxu0
        %v579 = vadd.f32 %v269, %v578
        %v580 = vpop.f32.mrf.mxu0
        %581 = vmatprep.mubr.f32.mxu0 0.0
        %v582 = vand.u32 %v239, 4294901760
        %v583 = vsub.f32 %v239, %v582
        %v584 = vand.u32 %v583, 4294901760
        %v585 = vsub.f32 %v583, %v584
        %v586 = vand.u32 %v585, 4294901760
        %587 = vmatmul.mubr.f32.gmra.mxu0 %v586
        %v588 = vpop.f32.mrf.mxu0
        %v589 = vadd.f32 %v269, %v588
        %v590 = vpop.f32.mrf.mxu0
        %591 = vmatprep.mubr.f32.mxu0 0.0
        %v592 = vand.u32 %v240, 4294901760
        %v593 = vsub.f32 %v240, %v592
        %v594 = vand.u32 %v593, 4294901760
        %v595 = vsub.f32 %v593, %v594
        %v596 = vand.u32 %v595, 4294901760
        %597 = vmatmul.mubr.f32.gmra.mxu0 %v596
        %v598 = vpop.f32.mrf.mxu0
        %v599 = vadd.f32 %v269, %v598
        %v600 = vpop.f32.mrf.mxu0
        %601 = vmatprep.mubr.f32.mxu0 0.0
        %v602 = vand.u32 %v241, 4294901760
        %v603 = vsub.f32 %v241, %v602
        %v604 = vand.u32 %v603, 4294901760
        %v605 = vsub.f32 %v603, %v604
        %v606 = vand.u32 %v605, 4294901760
        %607 = vmatmul.mubr.f32.gmra.mxu0 %v606
        %v608 = vpop.f32.mrf.mxu0
        %v609 = vadd.f32 %v269, %v608
        %v610 = vpop.f32.mrf.mxu0
        %611 = vmatprep.mubr.f32.mxu0 0.0
        %v612 = vand.u32 %v242, 4294901760
        %v613 = vsub.f32 %v242, %v612
        %v614 = vand.u32 %v613, 4294901760
        %v615 = vsub.f32 %v613, %v614
        %v616 = vand.u32 %v615, 4294901760
        %617 = vmatmul.mubr.f32.gmra.mxu0 %v616
        %v618 = vpop.f32.mrf.mxu0
        %v619 = vadd.f32 %v269, %v618
        %v620 = vpop.f32.mrf.mxu0
        %621 = vmatprep.mubr.f32.mxu0 0.0
        %v622 = vand.u32 %v243, 4294901760
        %v623 = vsub.f32 %v243, %v622
        %v624 = vand.u32 %v623, 4294901760
        %v625 = vsub.f32 %v623, %v624
        %v626 = vand.u32 %v625, 4294901760
        %627 = vmatmul.mubr.f32.gmra.mxu0 %v626
        %v628 = vpop.f32.mrf.mxu0
        %v629 = vadd.f32 %v269, %v628
        %v630 = vpop.f32.mrf.mxu0
        %631 = vmatprep.mubr.f32.mxu0 0.0
        %v632 = vand.u32 %v244, 4294901760
        %v633 = vsub.f32 %v244, %v632
        %v634 = vand.u32 %v633, 4294901760
        %v635 = vsub.f32 %v633, %v634
        %v636 = vand.u32 %v635, 4294901760
        %637 = vmatmul.mubr.f32.gmra.mxu0 %v636
        %v638 = vpop.f32.mrf.mxu0
        %v639 = vadd.f32 %v269, %v638
        %v640 = vpop.f32.mrf.mxu0
        %641 = vmatprep.mubr.f32.mxu0 0.0
        %v642 = vand.u32 %v245, 4294901760
        %v643 = vsub.f32 %v245, %v642
        %v644 = vand.u32 %v643, 4294901760
        %v645 = vsub.f32 %v643, %v644
        %v646 = vand.u32 %v645, 4294901760
        %647 = vmatmul.mubr.f32.gmra.mxu0 %v646
        %v648 = vpop.f32.mrf.mxu0
        %v649 = vadd.f32 %v269, %v648
        %v650 = vpop.f32.mrf.mxu0
        %651 = vmatprep.mubr.f32.mxu0 0.0
        %v652 = vand.u32 %v246, 4294901760
        %v653 = vsub.f32 %v246, %v652
        %v654 = vand.u32 %v653, 4294901760
        %v655 = vsub.f32 %v653, %v654
        %v656 = vand.u32 %v655, 4294901760
        %657 = vmatmul.mubr.f32.gmra.mxu0 %v656
        %v658 = vpop.f32.mrf.mxu0
        %v659 = vadd.f32 %v269, %v658
        %v660 = vpop.f32.mrf.mxu0
        %661 = vmatprep.mubr.f32.mxu0 0.0
        %v662 = vand.u32 %v247, 4294901760
        %v663 = vsub.f32 %v247, %v662
        %v664 = vand.u32 %v663, 4294901760
        %v665 = vsub.f32 %v663, %v664
        %v666 = vand.u32 %v665, 4294901760
        %667 = vmatmul.mubr.f32.gmra.mxu0 %v666
        %v668 = vpop.f32.mrf.mxu0
        %v669 = vadd.f32 %v269, %v668
        %v670 = vpop.f32.mrf.mxu0
        %671 = vdwg.mxu0
        %672 = vmatprep.subr.mxu0 0.0
        %v673 = vand.u32 %v263, 4294901760
        %v674 = vsub.f32 %v263, %v673
        %v675 = vand.u32 %v674, 4294901760
        %v676 = vsub.f32 %v674, %v675
        %v677 = vand.u32 %v676, 4294901760
        %678 = vmatpush1.msra.mxu0 %v677
        %679 = vmatprep.subr.mxu0 0.0
        %v680 = vand.u32 %v262, 4294901760
        %v681 = vsub.f32 %v262, %v680
        %v682 = vand.u32 %v681, 4294901760
        %v683 = vsub.f32 %v681, %v682
        %v684 = vand.u32 %v683, 4294901760
        %685 = vmatpush1.msra.mxu0 %v684
        %686 = vmatprep.subr.mxu0 0.0
        %v687 = vand.u32 %v261, 4294901760
        %v688 = vsub.f32 %v261, %v687
        %v689 = vand.u32 %v688, 4294901760
        %v690 = vsub.f32 %v688, %v689
        %v691 = vand.u32 %v690, 4294901760
        %692 = vmatpush1.msra.mxu0 %v691
        %693 = vmatprep.subr.mxu0 0.0
        %v694 = vand.u32 %v260, 4294901760
        %v695 = vsub.f32 %v260, %v694
        %v696 = vand.u32 %v695, 4294901760
        %v697 = vsub.f32 %v695, %v696
        %v698 = vand.u32 %v697, 4294901760
        %699 = vmatpush1.msra.mxu0 %v698
        %700 = vmatprep.subr.mxu0 0.0
        %v701 = vand.u32 %v259, 4294901760
        %v702 = vsub.f32 %v259, %v701
        %v703 = vand.u32 %v702, 4294901760
        %v704 = vsub.f32 %v702, %v703
        %v705 = vand.u32 %v704, 4294901760
        %706 = vmatpush1.msra.mxu0 %v705
        %707 = vmatprep.subr.mxu0 0.0
        %v708 = vand.u32 %v258, 4294901760
        %v709 = vsub.f32 %v258, %v708
        %v710 = vand.u32 %v709, 4294901760
        %v711 = vsub.f32 %v709, %v710
        %v712 = vand.u32 %v711, 4294901760
        %713 = vmatpush1.msra.mxu0 %v712
        %714 = vmatprep.subr.mxu0 0.0
        %v715 = vand.u32 %v257, 4294901760
        %v716 = vsub.f32 %v257, %v715
        %v717 = vand.u32 %v716, 4294901760
        %v718 = vsub.f32 %v716, %v717
        %v719 = vand.u32 %v718, 4294901760
        %720 = vmatpush1.msra.mxu0 %v719
        %721 = vmatprep.subr.mxu0 0.0
        %v722 = vand.u32 %v256, 4294901760
        %v723 = vsub.f32 %v256, %v722
        %v724 = vand.u32 %v723, 4294901760
        %v725 = vsub.f32 %v723, %v724
        %v726 = vand.u32 %v725, 4294901760
        %727 = vmatpush1.msra.mxu0 %v726
        %728 = vmatprep.subr.mxu0 0.0
        %v729 = vand.u32 %v255, 4294901760
        %v730 = vsub.f32 %v255, %v729
        %v731 = vand.u32 %v730, 4294901760
        %v732 = vsub.f32 %v730, %v731
        %v733 = vand.u32 %v732, 4294901760
        %734 = vmatpush1.msra.mxu0 %v733
        %735 = vmatprep.subr.mxu0 0.0
        %v736 = vand.u32 %v254, 4294901760
        %v737 = vsub.f32 %v254, %v736
        %v738 = vand.u32 %v737, 4294901760
        %v739 = vsub.f32 %v737, %v738
        %v740 = vand.u32 %v739, 4294901760
        %741 = vmatpush1.msra.mxu0 %v740
        %742 = vmatprep.subr.mxu0 0.0
        %v743 = vand.u32 %v253, 4294901760
        %v744 = vsub.f32 %v253, %v743
        %v745 = vand.u32 %v744, 4294901760
        %v746 = vsub.f32 %v744, %v745
        %v747 = vand.u32 %v746, 4294901760
        %748 = vmatpush1.msra.mxu0 %v747
        %749 = vmatprep.subr.mxu0 0.0
        %v750 = vand.u32 %v252, 4294901760
        %v751 = vsub.f32 %v252, %v750
        %v752 = vand.u32 %v751, 4294901760
        %v753 = vsub.f32 %v751, %v752
        %v754 = vand.u32 %v753, 4294901760
        %755 = vmatpush1.msra.mxu0 %v754
        %756 = vmatprep.subr.mxu0 0.0
        %v757 = vand.u32 %v251, 4294901760
        %v758 = vsub.f32 %v251, %v757
        %v759 = vand.u32 %v758, 4294901760
        %v760 = vsub.f32 %v758, %v759
        %v761 = vand.u32 %v760, 4294901760
        %762 = vmatpush1.msra.mxu0 %v761
        %763 = vmatprep.subr.mxu0 0.0
        %v764 = vand.u32 %v250, 4294901760
        %v765 = vsub.f32 %v250, %v764
        %v766 = vand.u32 %v765, 4294901760
        %v767 = vsub.f32 %v765, %v766
        %v768 = vand.u32 %v767, 4294901760
        %769 = vmatpush1.msra.mxu0 %v768
        %770 = vmatprep.subr.mxu0 0.0
        %v771 = vand.u32 %v249, 4294901760
        %v772 = vsub.f32 %v249, %v771
        %v773 = vand.u32 %v772, 4294901760
        %v774 = vsub.f32 %v772, %v773
        %v775 = vand.u32 %v774, 4294901760
        %776 = vmatpush1.msra.mxu0 %v775
        %777 = vmatprep.subr.mxu0 0.0
        %v778 = vand.u32 %v248, 4294901760
        %v779 = vsub.f32 %v248, %v778
        %v780 = vand.u32 %v779, 4294901760
        %v781 = vsub.f32 %v779, %v780
        %v782 = vand.u32 %v781, 4294901760
        %783 = vmatpush1.msra.mxu0 %v782
        %784 = vmatprep.subr.mxu0 0.0
        %785 = vmatpush2.msra.mxu0 0.0
        %786 = vmatprep.subr.mxu0 0.0
        %787 = vmatpush2.msra.mxu0 0.0
        %788 = vmatprep.subr.mxu0 0.0
        %789 = vmatpush2.msra.mxu0 0.0
        %790 = vmatprep.subr.mxu0 0.0
        %791 = vmatpush2.msra.mxu0 0.0
        %792 = vmatprep.subr.mxu0 0.0
        %793 = vmatpush2.msra.mxu0 0.0
        %794 = vmatprep.subr.mxu0 0.0
        %795 = vmatpush2.msra.mxu0 0.0
        %796 = vmatprep.subr.mxu0 0.0
        %797 = vmatpush2.msra.mxu0 0.0
        %798 = vmatprep.subr.mxu0 0.0
        %799 = vmatpush2.msra.mxu0 0.0
        %800 = vmatprep.subr.mxu0 0.0
        %801 = vmatpush2.msra.mxu0 0.0
        %802 = vmatprep.subr.mxu0 0.0
        %803 = vmatpush2.msra.mxu0 0.0
        %804 = vmatprep.subr.mxu0 0.0
        %805 = vmatpush2.msra.mxu0 0.0
        %806 = vmatprep.subr.mxu0 0.0
        %807 = vmatpush2.msra.mxu0 0.0
        %808 = vmatprep.subr.mxu0 0.0
        %809 = vmatpush2.msra.mxu0 0.0
        %810 = vmatprep.subr.mxu0 0.0
        %811 = vmatpush2.msra.mxu0 0.0
        %812 = vmatprep.subr.mxu0 0.0
        %813 = vmatpush2.msra.mxu0 0.0
        %814 = vmatprep.subr.mxu0 0.0
        %815 = vmatpush2.msra.mxu0 0.0
        %816 = vmatprep.mubr.f32.mxu0 0.0
        %v817 = vand.u32 %v216, 4294901760
        %818 = vmatmul.mubr.f32.gmra.mxu0 %v817
        %v819 = vpop.f32.mrf.mxu0
        %v820 = vadd.f32 %v359, %v819
        %v821 = vpop.f32.mrf.mxu0
        %822 = vmatprep.mubr.f32.mxu0 0.0
        %v823 = vand.u32 %v217, 4294901760
        %824 = vmatmul.mubr.f32.gmra.mxu0 %v823
        %v825 = vpop.f32.mrf.mxu0
        %v826 = vadd.f32 %v369, %v825
        %v827 = vpop.f32.mrf.mxu0
        %828 = vmatprep.mubr.f32.mxu0 0.0
        %v829 = vand.u32 %v218, 4294901760
        %830 = vmatmul.mubr.f32.gmra.mxu0 %v829
        %v831 = vpop.f32.mrf.mxu0
        %v832 = vadd.f32 %v379, %v831
        %v833 = vpop.f32.mrf.mxu0
        %834 = vmatprep.mubr.f32.mxu0 0.0
        %v835 = vand.u32 %v219, 4294901760
        %836 = vmatmul.mubr.f32.gmra.mxu0 %v835
        %v837 = vpop.f32.mrf.mxu0
        %v838 = vadd.f32 %v389, %v837
        %v839 = vpop.f32.mrf.mxu0
        %840 = vmatprep.mubr.f32.mxu0 0.0
        %v841 = vand.u32 %v220, 4294901760
        %842 = vmatmul.mubr.f32.gmra.mxu0 %v841
        %v843 = vpop.f32.mrf.mxu0
        %v844 = vadd.f32 %v399, %v843
        %v845 = vpop.f32.mrf.mxu0
        %846 = vmatprep.mubr.f32.mxu0 0.0
        %v847 = vand.u32 %v221, 4294901760
        %848 = vmatmul.mubr.f32.gmra.mxu0 %v847
        %v849 = vpop.f32.mrf.mxu0
        %v850 = vadd.f32 %v409, %v849
        %v851 = vpop.f32.mrf.mxu0
        %852 = vmatprep.mubr.f32.mxu0 0.0
        %v853 = vand.u32 %v222, 4294901760
        %854 = vmatmul.mubr.f32.gmra.mxu0 %v853
        %v855 = vpop.f32.mrf.mxu0
        %v856 = vadd.f32 %v419, %v855
        %v857 = vpop.f32.mrf.mxu0
        %858 = vmatprep.mubr.f32.mxu0 0.0
        %v859 = vand.u32 %v223, 4294901760
        %860 = vmatmul.mubr.f32.gmra.mxu0 %v859
        %v861 = vpop.f32.mrf.mxu0
        %v862 = vadd.f32 %v429, %v861
        %v863 = vpop.f32.mrf.mxu0
        %864 = vmatprep.mubr.f32.mxu0 0.0
        %v865 = vand.u32 %v224, 4294901760
        %866 = vmatmul.mubr.f32.gmra.mxu0 %v865
        %v867 = vpop.f32.mrf.mxu0
        %v868 = vadd.f32 %v439, %v867
        %v869 = vpop.f32.mrf.mxu0
        %870 = vmatprep.mubr.f32.mxu0 0.0
        %v871 = vand.u32 %v225, 4294901760
        %872 = vmatmul.mubr.f32.gmra.mxu0 %v871
        %v873 = vpop.f32.mrf.mxu0
        %v874 = vadd.f32 %v449, %v873
        %v875 = vpop.f32.mrf.mxu0
        %876 = vmatprep.mubr.f32.mxu0 0.0
        %v877 = vand.u32 %v226, 4294901760
        %878 = vmatmul.mubr.f32.gmra.mxu0 %v877
        %v879 = vpop.f32.mrf.mxu0
        %v880 = vadd.f32 %v459, %v879
        %v881 = vpop.f32.mrf.mxu0
        %882 = vmatprep.mubr.f32.mxu0 0.0
        %v883 = vand.u32 %v227, 4294901760
        %884 = vmatmul.mubr.f32.gmra.mxu0 %v883
        %v885 = vpop.f32.mrf.mxu0
        %v886 = vadd.f32 %v469, %v885
        %v887 = vpop.f32.mrf.mxu0
        %888 = vmatprep.mubr.f32.mxu0 0.0
        %v889 = vand.u32 %v228, 4294901760
        %890 = vmatmul.mubr.f32.gmra.mxu0 %v889
        %v891 = vpop.f32.mrf.mxu0
        %v892 = vadd.f32 %v479, %v891
        %v893 = vpop.f32.mrf.mxu0
        %894 = vmatprep.mubr.f32.mxu0 0.0
        %v895 = vand.u32 %v229, 4294901760
        %896 = vmatmul.mubr.f32.gmra.mxu0 %v895
        %v897 = vpop.f32.mrf.mxu0
        %v898 = vadd.f32 %v489, %v897
        %v899 = vpop.f32.mrf.mxu0
        %900 = vmatprep.mubr.f32.mxu0 0.0
        %v901 = vand.u32 %v230, 4294901760
        %902 = vmatmul.mubr.f32.gmra.mxu0 %v901
        %v903 = vpop.f32.mrf.mxu0
        %v904 = vadd.f32 %v499, %v903
        %v905 = vpop.f32.mrf.mxu0
        %906 = vmatprep.mubr.f32.mxu0 0.0
        %v907 = vand.u32 %v231, 4294901760
        %908 = vmatmul.mubr.f32.gmra.mxu0 %v907
        %v909 = vpop.f32.mrf.mxu0
        %v910 = vadd.f32 %v509, %v909
        %v911 = vpop.f32.mrf.mxu0
        %912 = vmatprep.mubr.f32.mxu0 0.0
        %v913 = vand.u32 %v232, 4294901760
        %914 = vmatmul.mubr.f32.gmra.mxu0 %v913
        %v915 = vpop.f32.mrf.mxu0
        %v916 = vadd.f32 %v519, %v915
        %v917 = vpop.f32.mrf.mxu0
        %918 = vmatprep.mubr.f32.mxu0 0.0
        %v919 = vand.u32 %v233, 4294901760
        %920 = vmatmul.mubr.f32.gmra.mxu0 %v919
        %v921 = vpop.f32.mrf.mxu0
        %v922 = vadd.f32 %v529, %v921
        %v923 = vpop.f32.mrf.mxu0
        %924 = vmatprep.mubr.f32.mxu0 0.0
        %v925 = vand.u32 %v234, 4294901760
        %926 = vmatmul.mubr.f32.gmra.mxu0 %v925
        %v927 = vpop.f32.mrf.mxu0
        %v928 = vadd.f32 %v539, %v927
        %v929 = vpop.f32.mrf.mxu0
        %930 = vmatprep.mubr.f32.mxu0 0.0
        %v931 = vand.u32 %v235, 4294901760
        %932 = vmatmul.mubr.f32.gmra.mxu0 %v931
        %v933 = vpop.f32.mrf.mxu0
        %v934 = vadd.f32 %v549, %v933
        %v935 = vpop.f32.mrf.mxu0
        %936 = vmatprep.mubr.f32.mxu0 0.0
        %v937 = vand.u32 %v236, 4294901760
        %938 = vmatmul.mubr.f32.gmra.mxu0 %v937
        %v939 = vpop.f32.mrf.mxu0
        %v940 = vadd.f32 %v559, %v939
        %v941 = vpop.f32.mrf.mxu0
        %942 = vmatprep.mubr.f32.mxu0 0.0
        %v943 = vand.u32 %v237, 4294901760
        %944 = vmatmul.mubr.f32.gmra.mxu0 %v943
        %v945 = vpop.f32.mrf.mxu0
        %v946 = vadd.f32 %v569, %v945
        %v947 = vpop.f32.mrf.mxu0
        %948 = vmatprep.mubr.f32.mxu0 0.0
        %v949 = vand.u32 %v238, 4294901760
        %950 = vmatmul.mubr.f32.gmra.mxu0 %v949
        %v951 = vpop.f32.mrf.mxu0
        %v952 = vadd.f32 %v579, %v951
        %v953 = vpop.f32.mrf.mxu0
        %954 = vmatprep.mubr.f32.mxu0 0.0
        %v955 = vand.u32 %v239, 4294901760
        %956 = vmatmul.mubr.f32.gmra.mxu0 %v955
        %v957 = vpop.f32.mrf.mxu0
        %v958 = vadd.f32 %v589, %v957
        %v959 = vpop.f32.mrf.mxu0
        %960 = vmatprep.mubr.f32.mxu0 0.0
        %v961 = vand.u32 %v240, 4294901760
        %962 = vmatmul.mubr.f32.gmra.mxu0 %v961
        %v963 = vpop.f32.mrf.mxu0
        %v964 = vadd.f32 %v599, %v963
        %v965 = vpop.f32.mrf.mxu0
        %966 = vmatprep.mubr.f32.mxu0 0.0
        %v967 = vand.u32 %v241, 4294901760
        %968 = vmatmul.mubr.f32.gmra.mxu0 %v967
        %v969 = vpop.f32.mrf.mxu0
        %v970 = vadd.f32 %v609, %v969
        %v971 = vpop.f32.mrf.mxu0
        %972 = vmatprep.mubr.f32.mxu0 0.0
        %v973 = vand.u32 %v242, 4294901760
        %974 = vmatmul.mubr.f32.gmra.mxu0 %v973
        %v975 = vpop.f32.mrf.mxu0
        %v976 = vadd.f32 %v619, %v975
        %v977 = vpop.f32.mrf.mxu0
        %978 = vmatprep.mubr.f32.mxu0 0.0
        %v979 = vand.u32 %v243, 4294901760
        %980 = vmatmul.mubr.f32.gmra.mxu0 %v979
        %v981 = vpop.f32.mrf.mxu0
        %v982 = vadd.f32 %v629, %v981
        %v983 = vpop.f32.mrf.mxu0
        %984 = vmatprep.mubr.f32.mxu0 0.0
        %v985 = vand.u32 %v244, 4294901760
        %986 = vmatmul.mubr.f32.gmra.mxu0 %v985
        %v987 = vpop.f32.mrf.mxu0
        %v988 = vadd.f32 %v639, %v987
        %v989 = vpop.f32.mrf.mxu0
        %990 = vmatprep.mubr.f32.mxu0 0.0
        %v991 = vand.u32 %v245, 4294901760
        %992 = vmatmul.mubr.f32.gmra.mxu0 %v991
        %v993 = vpop.f32.mrf.mxu0
        %v994 = vadd.f32 %v649, %v993
        %v995 = vpop.f32.mrf.mxu0
        %996 = vmatprep.mubr.f32.mxu0 0.0
        %v997 = vand.u32 %v246, 4294901760
        %998 = vmatmul.mubr.f32.gmra.mxu0 %v997
        %v999 = vpop.f32.mrf.mxu0
        %v1000 = vadd.f32 %v659, %v999
        %v1001 = vpop.f32.mrf.mxu0
        %1002 = vmatprep.mubr.f32.mxu0 0.0
        %v1003 = vand.u32 %v247, 4294901760
        %1004 = vmatmul.mubr.f32.gmra.mxu0 %v1003
        %v1005 = vpop.f32.mrf.mxu0
        %v1006 = vadd.f32 %v669, %v1005
        %v1007 = vpop.f32.mrf.mxu0
        %1008 = vdwg.mxu0
        %1009 = vmatprep.subr.mxu0 0.0
        %v1010 = vand.u32 %v263, 4294901760
        %v1011 = vsub.f32 %v263, %v1010
        %1012 = vmatpush1.msra.mxu0 %v1011
        %1013 = vmatprep.subr.mxu0 0.0
        %v1014 = vand.u32 %v262, 4294901760
        %v1015 = vsub.f32 %v262, %v1014
        %1016 = vmatpush1.msra.mxu0 %v1015
        %1017 = vmatprep.subr.mxu0 0.0
        %v1018 = vand.u32 %v261, 4294901760
        %v1019 = vsub.f32 %v261, %v1018
        %1020 = vmatpush1.msra.mxu0 %v1019
        %1021 = vmatprep.subr.mxu0 0.0
        %v1022 = vand.u32 %v260, 4294901760
        %v1023 = vsub.f32 %v260, %v1022
        %1024 = vmatpush1.msra.mxu0 %v1023
        %1025 = vmatprep.subr.mxu0 0.0
        %v1026 = vand.u32 %v259, 4294901760
        %v1027 = vsub.f32 %v259, %v1026
        %1028 = vmatpush1.msra.mxu0 %v1027
        %1029 = vmatprep.subr.mxu0 0.0
        %v1030 = vand.u32 %v258, 4294901760
        %v1031 = vsub.f32 %v258, %v1030
        %1032 = vmatpush1.msra.mxu0 %v1031
        %1033 = vmatprep.subr.mxu0 0.0
        %v1034 = vand.u32 %v257, 4294901760
        %v1035 = vsub.f32 %v257, %v1034
        %1036 = vmatpush1.msra.mxu0 %v1035
        %1037 = vmatprep.subr.mxu0 0.0
        %v1038 = vand.u32 %v256, 4294901760
        %v1039 = vsub.f32 %v256, %v1038
        %1040 = vmatpush1.msra.mxu0 %v1039
        %1041 = vmatprep.subr.mxu0 0.0
        %v1042 = vand.u32 %v255, 4294901760
        %v1043 = vsub.f32 %v255, %v1042
        %1044 = vmatpush1.msra.mxu0 %v1043
        %1045 = vmatprep.subr.mxu0 0.0
        %v1046 = vand.u32 %v254, 4294901760
        %v1047 = vsub.f32 %v254, %v1046
        %1048 = vmatpush1.msra.mxu0 %v1047
        %1049 = vmatprep.subr.mxu0 0.0
        %v1050 = vand.u32 %v253, 4294901760
        %v1051 = vsub.f32 %v253, %v1050
        %1052 = vmatpush1.msra.mxu0 %v1051
        %1053 = vmatprep.subr.mxu0 0.0
        %v1054 = vand.u32 %v252, 4294901760
        %v1055 = vsub.f32 %v252, %v1054
        %1056 = vmatpush1.msra.mxu0 %v1055
        %1057 = vmatprep.subr.mxu0 0.0
        %v1058 = vand.u32 %v251, 4294901760
        %v1059 = vsub.f32 %v251, %v1058
        %1060 = vmatpush1.msra.mxu0 %v1059
        %1061 = vmatprep.subr.mxu0 0.0
        %v1062 = vand.u32 %v250, 4294901760
        %v1063 = vsub.f32 %v250, %v1062
        %1064 = vmatpush1.msra.mxu0 %v1063
        %1065 = vmatprep.subr.mxu0 0.0
        %v1066 = vand.u32 %v249, 4294901760
        %v1067 = vsub.f32 %v249, %v1066
        %1068 = vmatpush1.msra.mxu0 %v1067
        %1069 = vmatprep.subr.mxu0 0.0
        %v1070 = vand.u32 %v248, 4294901760
        %v1071 = vsub.f32 %v248, %v1070
        %1072 = vmatpush1.msra.mxu0 %v1071
        %1073 = vmatprep.subr.mxu0 0.0
        %1074 = vmatpush2.msra.mxu0 0.0
        %1075 = vmatprep.subr.mxu0 0.0
        %1076 = vmatpush2.msra.mxu0 0.0
        %1077 = vmatprep.subr.mxu0 0.0
        %1078 = vmatpush2.msra.mxu0 0.0
        %1079 = vmatprep.subr.mxu0 0.0
        %1080 = vmatpush2.msra.mxu0 0.0
        %1081 = vmatprep.subr.mxu0 0.0
        %1082 = vmatpush2.msra.mxu0 0.0
        %1083 = vmatprep.subr.mxu0 0.0
        %1084 = vmatpush2.msra.mxu0 0.0
        %1085 = vmatprep.subr.mxu0 0.0
        %1086 = vmatpush2.msra.mxu0 0.0
        %1087 = vmatprep.subr.mxu0 0.0
        %1088 = vmatpush2.msra.mxu0 0.0
        %1089 = vmatprep.subr.mxu0 0.0
        %1090 = vmatpush2.msra.mxu0 0.0
        %1091 = vmatprep.subr.mxu0 0.0
        %1092 = vmatpush2.msra.mxu0 0.0
        %1093 = vmatprep.subr.mxu0 0.0
        %1094 = vmatpush2.msra.mxu0 0.0
        %1095 = vmatprep.subr.mxu0 0.0
        %1096 = vmatpush2.msra.mxu0 0.0
        %1097 = vmatprep.subr.mxu0 0.0
        %1098 = vmatpush2.msra.mxu0 0.0
        %1099 = vmatprep.subr.mxu0 0.0
        %1100 = vmatpush2.msra.mxu0 0.0
        %1101 = vmatprep.subr.mxu0 0.0
        %1102 = vmatpush2.msra.mxu0 0.0
        %1103 = vmatprep.subr.mxu0 0.0
        %1104 = vmatpush2.msra.mxu0 0.0
        %1105 = vmatprep.mubr.f32.mxu0 0.0
        %v1106 = vand.u32 %v216, 4294901760
        %v1107 = vsub.f32 %v216, %v1106
        %1108 = vmatmul.mubr.f32.gmra.mxu0 %v1107
        %v1109 = vpop.f32.mrf.mxu0
        %v1110 = vadd.f32 %v820, %v1109
        %v1111 = vpop.f32.mrf.mxu0
        %1112 = vmatprep.mubr.f32.mxu0 0.0
        %v1113 = vand.u32 %v217, 4294901760
        %v1114 = vsub.f32 %v217, %v1113
        %1115 = vmatmul.mubr.f32.gmra.mxu0 %v1114
        %v1116 = vpop.f32.mrf.mxu0
        %v1117 = vadd.f32 %v826, %v1116
        %v1118 = vpop.f32.mrf.mxu0
        %1119 = vmatprep.mubr.f32.mxu0 0.0
        %v1120 = vand.u32 %v218, 4294901760
        %v1121 = vsub.f32 %v218, %v1120
        %1122 = vmatmul.mubr.f32.gmra.mxu0 %v1121
        %v1123 = vpop.f32.mrf.mxu0
        %v1124 = vadd.f32 %v832, %v1123
        %v1125 = vpop.f32.mrf.mxu0
        %1126 = vmatprep.mubr.f32.mxu0 0.0
        %v1127 = vand.u32 %v219, 4294901760
        %v1128 = vsub.f32 %v219, %v1127
        %1129 = vmatmul.mubr.f32.gmra.mxu0 %v1128
        %v1130 = vpop.f32.mrf.mxu0
        %v1131 = vadd.f32 %v838, %v1130
        %v1132 = vpop.f32.mrf.mxu0
        %1133 = vmatprep.mubr.f32.mxu0 0.0
        %v1134 = vand.u32 %v220, 4294901760
        %v1135 = vsub.f32 %v220, %v1134
        %1136 = vmatmul.mubr.f32.gmra.mxu0 %v1135
        %v1137 = vpop.f32.mrf.mxu0
        %v1138 = vadd.f32 %v844, %v1137
        %v1139 = vpop.f32.mrf.mxu0
        %1140 = vmatprep.mubr.f32.mxu0 0.0
        %v1141 = vand.u32 %v221, 4294901760
        %v1142 = vsub.f32 %v221, %v1141
        %1143 = vmatmul.mubr.f32.gmra.mxu0 %v1142
        %v1144 = vpop.f32.mrf.mxu0
        %v1145 = vadd.f32 %v850, %v1144
        %v1146 = vpop.f32.mrf.mxu0
        %1147 = vmatprep.mubr.f32.mxu0 0.0
        %v1148 = vand.u32 %v222, 4294901760
        %v1149 = vsub.f32 %v222, %v1148
        %1150 = vmatmul.mubr.f32.gmra.mxu0 %v1149
        %v1151 = vpop.f32.mrf.mxu0
        %v1152 = vadd.f32 %v856, %v1151
        %v1153 = vpop.f32.mrf.mxu0
        %1154 = vmatprep.mubr.f32.mxu0 0.0
        %v1155 = vand.u32 %v223, 4294901760
        %v1156 = vsub.f32 %v223, %v1155
        %1157 = vmatmul.mubr.f32.gmra.mxu0 %v1156
        %v1158 = vpop.f32.mrf.mxu0
        %v1159 = vadd.f32 %v862, %v1158
        %v1160 = vpop.f32.mrf.mxu0
        %1161 = vmatprep.mubr.f32.mxu0 0.0
        %v1162 = vand.u32 %v224, 4294901760
        %v1163 = vsub.f32 %v224, %v1162
        %1164 = vmatmul.mubr.f32.gmra.mxu0 %v1163
        %v1165 = vpop.f32.mrf.mxu0
        %v1166 = vadd.f32 %v868, %v1165
        %v1167 = vpop.f32.mrf.mxu0
        %1168 = vmatprep.mubr.f32.mxu0 0.0
        %v1169 = vand.u32 %v225, 4294901760
        %v1170 = vsub.f32 %v225, %v1169
        %1171 = vmatmul.mubr.f32.gmra.mxu0 %v1170
        %v1172 = vpop.f32.mrf.mxu0
        %v1173 = vadd.f32 %v874, %v1172
        %v1174 = vpop.f32.mrf.mxu0
        %1175 = vmatprep.mubr.f32.mxu0 0.0
        %v1176 = vand.u32 %v226, 4294901760
        %v1177 = vsub.f32 %v226, %v1176
        %1178 = vmatmul.mubr.f32.gmra.mxu0 %v1177
        %v1179 = vpop.f32.mrf.mxu0
        %v1180 = vadd.f32 %v880, %v1179
        %v1181 = vpop.f32.mrf.mxu0
        %1182 = vmatprep.mubr.f32.mxu0 0.0
        %v1183 = vand.u32 %v227, 4294901760
        %v1184 = vsub.f32 %v227, %v1183
        %1185 = vmatmul.mubr.f32.gmra.mxu0 %v1184
        %v1186 = vpop.f32.mrf.mxu0
        %v1187 = vadd.f32 %v886, %v1186
        %v1188 = vpop.f32.mrf.mxu0
        %1189 = vmatprep.mubr.f32.mxu0 0.0
        %v1190 = vand.u32 %v228, 4294901760
        %v1191 = vsub.f32 %v228, %v1190
        %1192 = vmatmul.mubr.f32.gmra.mxu0 %v1191
        %v1193 = vpop.f32.mrf.mxu0
        %v1194 = vadd.f32 %v892, %v1193
        %v1195 = vpop.f32.mrf.mxu0
        %1196 = vmatprep.mubr.f32.mxu0 0.0
        %v1197 = vand.u32 %v229, 4294901760
        %v1198 = vsub.f32 %v229, %v1197
        %1199 = vmatmul.mubr.f32.gmra.mxu0 %v1198
        %v1200 = vpop.f32.mrf.mxu0
        %v1201 = vadd.f32 %v898, %v1200
        %v1202 = vpop.f32.mrf.mxu0
        %1203 = vmatprep.mubr.f32.mxu0 0.0
        %v1204 = vand.u32 %v230, 4294901760
        %v1205 = vsub.f32 %v230, %v1204
        %1206 = vmatmul.mubr.f32.gmra.mxu0 %v1205
        %v1207 = vpop.f32.mrf.mxu0
        %v1208 = vadd.f32 %v904, %v1207
        %v1209 = vpop.f32.mrf.mxu0
        %1210 = vmatprep.mubr.f32.mxu0 0.0
        %v1211 = vand.u32 %v231, 4294901760
        %v1212 = vsub.f32 %v231, %v1211
        %1213 = vmatmul.mubr.f32.gmra.mxu0 %v1212
        %v1214 = vpop.f32.mrf.mxu0
        %v1215 = vadd.f32 %v910, %v1214
        %v1216 = vpop.f32.mrf.mxu0
        %1217 = vmatprep.mubr.f32.mxu0 0.0
        %v1218 = vand.u32 %v232, 4294901760
        %v1219 = vsub.f32 %v232, %v1218
        %1220 = vmatmul.mubr.f32.gmra.mxu0 %v1219
        %v1221 = vpop.f32.mrf.mxu0
        %v1222 = vadd.f32 %v916, %v1221
        %v1223 = vpop.f32.mrf.mxu0
        %1224 = vmatprep.mubr.f32.mxu0 0.0
        %v1225 = vand.u32 %v233, 4294901760
        %v1226 = vsub.f32 %v233, %v1225
        %1227 = vmatmul.mubr.f32.gmra.mxu0 %v1226
        %v1228 = vpop.f32.mrf.mxu0
        %v1229 = vadd.f32 %v922, %v1228
        %v1230 = vpop.f32.mrf.mxu0
        %1231 = vmatprep.mubr.f32.mxu0 0.0
        %v1232 = vand.u32 %v234, 4294901760
        %v1233 = vsub.f32 %v234, %v1232
        %1234 = vmatmul.mubr.f32.gmra.mxu0 %v1233
        %v1235 = vpop.f32.mrf.mxu0
        %v1236 = vadd.f32 %v928, %v1235
        %v1237 = vpop.f32.mrf.mxu0
        %1238 = vmatprep.mubr.f32.mxu0 0.0
        %v1239 = vand.u32 %v235, 4294901760
        %v1240 = vsub.f32 %v235, %v1239
        %1241 = vmatmul.mubr.f32.gmra.mxu0 %v1240
        %v1242 = vpop.f32.mrf.mxu0
        %v1243 = vadd.f32 %v934, %v1242
        %v1244 = vpop.f32.mrf.mxu0
        %1245 = vmatprep.mubr.f32.mxu0 0.0
        %v1246 = vand.u32 %v236, 4294901760
        %v1247 = vsub.f32 %v236, %v1246
        %1248 = vmatmul.mubr.f32.gmra.mxu0 %v1247
        %v1249 = vpop.f32.mrf.mxu0
        %v1250 = vadd.f32 %v940, %v1249
        %v1251 = vpop.f32.mrf.mxu0
        %1252 = vmatprep.mubr.f32.mxu0 0.0
        %v1253 = vand.u32 %v237, 4294901760
        %v1254 = vsub.f32 %v237, %v1253
        %1255 = vmatmul.mubr.f32.gmra.mxu0 %v1254
        %v1256 = vpop.f32.mrf.mxu0
        %v1257 = vadd.f32 %v946, %v1256
        %v1258 = vpop.f32.mrf.mxu0
        %1259 = vmatprep.mubr.f32.mxu0 0.0
        %v1260 = vand.u32 %v238, 4294901760
        %v1261 = vsub.f32 %v238, %v1260
        %1262 = vmatmul.mubr.f32.gmra.mxu0 %v1261
        %v1263 = vpop.f32.mrf.mxu0
        %v1264 = vadd.f32 %v952, %v1263
        %v1265 = vpop.f32.mrf.mxu0
        %1266 = vmatprep.mubr.f32.mxu0 0.0
        %v1267 = vand.u32 %v239, 4294901760
        %v1268 = vsub.f32 %v239, %v1267
        %1269 = vmatmul.mubr.f32.gmra.mxu0 %v1268
        %v1270 = vpop.f32.mrf.mxu0
        %v1271 = vadd.f32 %v958, %v1270
        %v1272 = vpop.f32.mrf.mxu0
        %1273 = vmatprep.mubr.f32.mxu0 0.0
        %v1274 = vand.u32 %v240, 4294901760
        %v1275 = vsub.f32 %v240, %v1274
        %1276 = vmatmul.mubr.f32.gmra.mxu0 %v1275
        %v1277 = vpop.f32.mrf.mxu0
        %v1278 = vadd.f32 %v964, %v1277
        %v1279 = vpop.f32.mrf.mxu0
        %1280 = vmatprep.mubr.f32.mxu0 0.0
        %v1281 = vand.u32 %v241, 4294901760
        %v1282 = vsub.f32 %v241, %v1281
        %1283 = vmatmul.mubr.f32.gmra.mxu0 %v1282
        %v1284 = vpop.f32.mrf.mxu0
        %v1285 = vadd.f32 %v970, %v1284
        %v1286 = vpop.f32.mrf.mxu0
        %1287 = vmatprep.mubr.f32.mxu0 0.0
        %v1288 = vand.u32 %v242, 4294901760
        %v1289 = vsub.f32 %v242, %v1288
        %1290 = vmatmul.mubr.f32.gmra.mxu0 %v1289
        %v1291 = vpop.f32.mrf.mxu0
        %v1292 = vadd.f32 %v976, %v1291
        %v1293 = vpop.f32.mrf.mxu0
        %1294 = vmatprep.mubr.f32.mxu0 0.0
        %v1295 = vand.u32 %v243, 4294901760
        %v1296 = vsub.f32 %v243, %v1295
        %1297 = vmatmul.mubr.f32.gmra.mxu0 %v1296
        %v1298 = vpop.f32.mrf.mxu0
        %v1299 = vadd.f32 %v982, %v1298
        %v1300 = vpop.f32.mrf.mxu0
        %1301 = vmatprep.mubr.f32.mxu0 0.0
        %v1302 = vand.u32 %v244, 4294901760
        %v1303 = vsub.f32 %v244, %v1302
        %1304 = vmatmul.mubr.f32.gmra.mxu0 %v1303
        %v1305 = vpop.f32.mrf.mxu0
        %v1306 = vadd.f32 %v988, %v1305
        %v1307 = vpop.f32.mrf.mxu0
        %1308 = vmatprep.mubr.f32.mxu0 0.0
        %v1309 = vand.u32 %v245, 4294901760
        %v1310 = vsub.f32 %v245, %v1309
        %1311 = vmatmul.mubr.f32.gmra.mxu0 %v1310
        %v1312 = vpop.f32.mrf.mxu0
        %v1313 = vadd.f32 %v994, %v1312
        %v1314 = vpop.f32.mrf.mxu0
        %1315 = vmatprep.mubr.f32.mxu0 0.0
        %v1316 = vand.u32 %v246, 4294901760
        %v1317 = vsub.f32 %v246, %v1316
        %1318 = vmatmul.mubr.f32.gmra.mxu0 %v1317
        %v1319 = vpop.f32.mrf.mxu0
        %v1320 = vadd.f32 %v1000, %v1319
        %v1321 = vpop.f32.mrf.mxu0
        %1322 = vmatprep.mubr.f32.mxu0 0.0
        %v1323 = vand.u32 %v247, 4294901760
        %v1324 = vsub.f32 %v247, %v1323
        %1325 = vmatmul.mubr.f32.gmra.mxu0 %v1324
        %v1326 = vpop.f32.mrf.mxu0
        %v1327 = vadd.f32 %v1006, %v1326
        %v1328 = vpop.f32.mrf.mxu0
        %1329 = vdwg.mxu0
        %1330 = vmatprep.subr.mxu0 0.0
        %v1331 = vand.u32 %v263, 4294901760
        %1332 = vmatpush1.msra.mxu0 %v1331
        %1333 = vmatprep.subr.mxu0 0.0
        %v1334 = vand.u32 %v262, 4294901760
        %1335 = vmatpush1.msra.mxu0 %v1334
        %1336 = vmatprep.subr.mxu0 0.0
        %v1337 = vand.u32 %v261, 4294901760
        %1338 = vmatpush1.msra.mxu0 %v1337
        %1339 = vmatprep.subr.mxu0 0.0
        %v1340 = vand.u32 %v260, 4294901760
        %1341 = vmatpush1.msra.mxu0 %v1340
        %1342 = vmatprep.subr.mxu0 0.0
        %v1343 = vand.u32 %v259, 4294901760
        %1344 = vmatpush1.msra.mxu0 %v1343
        %1345 = vmatprep.subr.mxu0 0.0
        %v1346 = vand.u32 %v258, 4294901760
        %1347 = vmatpush1.msra.mxu0 %v1346
        %1348 = vmatprep.subr.mxu0 0.0
        %v1349 = vand.u32 %v257, 4294901760
        %1350 = vmatpush1.msra.mxu0 %v1349
        %1351 = vmatprep.subr.mxu0 0.0
        %v1352 = vand.u32 %v256, 4294901760
        %1353 = vmatpush1.msra.mxu0 %v1352
        %1354 = vmatprep.subr.mxu0 0.0
        %v1355 = vand.u32 %v255, 4294901760
        %1356 = vmatpush1.msra.mxu0 %v1355
        %1357 = vmatprep.subr.mxu0 0.0
        %v1358 = vand.u32 %v254, 4294901760
        %1359 = vmatpush1.msra.mxu0 %v1358
        %1360 = vmatprep.subr.mxu0 0.0
        %v1361 = vand.u32 %v253, 4294901760
        %1362 = vmatpush1.msra.mxu0 %v1361
        %1363 = vmatprep.subr.mxu0 0.0
        %v1364 = vand.u32 %v252, 4294901760
        %1365 = vmatpush1.msra.mxu0 %v1364
        %1366 = vmatprep.subr.mxu0 0.0
        %v1367 = vand.u32 %v251, 4294901760
        %1368 = vmatpush1.msra.mxu0 %v1367
        %1369 = vmatprep.subr.mxu0 0.0
        %v1370 = vand.u32 %v250, 4294901760
        %1371 = vmatpush1.msra.mxu0 %v1370
        %1372 = vmatprep.subr.mxu0 0.0
        %v1373 = vand.u32 %v249, 4294901760
        %1374 = vmatpush1.msra.mxu0 %v1373
        %1375 = vmatprep.subr.mxu0 0.0
        %v1376 = vand.u32 %v248, 4294901760
        %1377 = vmatpush1.msra.mxu0 %v1376
        %1378 = vmatprep.subr.mxu0 0.0
        %1379 = vmatpush2.msra.mxu0 0.0
        %1380 = vmatprep.subr.mxu0 0.0
        %1381 = vmatpush2.msra.mxu0 0.0
        %1382 = vmatprep.subr.mxu0 0.0
        %1383 = vmatpush2.msra.mxu0 0.0
        %1384 = vmatprep.subr.mxu0 0.0
        %1385 = vmatpush2.msra.mxu0 0.0
        %1386 = vmatprep.subr.mxu0 0.0
        %1387 = vmatpush2.msra.mxu0 0.0
        %1388 = vmatprep.subr.mxu0 0.0
        %1389 = vmatpush2.msra.mxu0 0.0
        %1390 = vmatprep.subr.mxu0 0.0
        %1391 = vmatpush2.msra.mxu0 0.0
        %1392 = vmatprep.subr.mxu0 0.0
        %1393 = vmatpush2.msra.mxu0 0.0
        %1394 = vmatprep.subr.mxu0 0.0
        %1395 = vmatpush2.msra.mxu0 0.0
        %1396 = vmatprep.subr.mxu0 0.0
        %1397 = vmatpush2.msra.mxu0 0.0
        %1398 = vmatprep.subr.mxu0 0.0
        %1399 = vmatpush2.msra.mxu0 0.0
        %1400 = vmatprep.subr.mxu0 0.0
        %1401 = vmatpush2.msra.mxu0 0.0
        %1402 = vmatprep.subr.mxu0 0.0
        %1403 = vmatpush2.msra.mxu0 0.0
        %1404 = vmatprep.subr.mxu0 0.0
        %1405 = vmatpush2.msra.mxu0 0.0
        %1406 = vmatprep.subr.mxu0 0.0
        %1407 = vmatpush2.msra.mxu0 0.0
        %1408 = vmatprep.subr.mxu0 0.0
        %1409 = vmatpush2.msra.mxu0 0.0
        %1410 = vmatprep.mubr.f32.mxu0 0.0
        %v1411 = vand.u32 %v216, 4294901760
        %v1412 = vsub.f32 %v216, %v1411
        %v1413 = vand.u32 %v1412, 4294901760
        %1414 = vmatmul.mubr.f32.gmra.mxu0 %v1413
        %v1415 = vpop.f32.mrf.mxu0
        %v1416 = vadd.f32 %v1110, %v1415
        %v1417 = vpop.f32.mrf.mxu0
        %1418 = vmatprep.mubr.f32.mxu0 0.0
        %v1419 = vand.u32 %v217, 4294901760
        %v1420 = vsub.f32 %v217, %v1419
        %v1421 = vand.u32 %v1420, 4294901760
        %1422 = vmatmul.mubr.f32.gmra.mxu0 %v1421
        %v1423 = vpop.f32.mrf.mxu0
        %v1424 = vadd.f32 %v1117, %v1423
        %v1425 = vpop.f32.mrf.mxu0
        %1426 = vmatprep.mubr.f32.mxu0 0.0
        %v1427 = vand.u32 %v218, 4294901760
        %v1428 = vsub.f32 %v218, %v1427
        %v1429 = vand.u32 %v1428, 4294901760
        %1430 = vmatmul.mubr.f32.gmra.mxu0 %v1429
        %v1431 = vpop.f32.mrf.mxu0
        %v1432 = vadd.f32 %v1124, %v1431
        %v1433 = vpop.f32.mrf.mxu0
        %1434 = vmatprep.mubr.f32.mxu0 0.0
        %v1435 = vand.u32 %v219, 4294901760
        %v1436 = vsub.f32 %v219, %v1435
        %v1437 = vand.u32 %v1436, 4294901760
        %1438 = vmatmul.mubr.f32.gmra.mxu0 %v1437
        %v1439 = vpop.f32.mrf.mxu0
        %v1440 = vadd.f32 %v1131, %v1439
        %v1441 = vpop.f32.mrf.mxu0
        %1442 = vmatprep.mubr.f32.mxu0 0.0
        %v1443 = vand.u32 %v220, 4294901760
        %v1444 = vsub.f32 %v220, %v1443
        %v1445 = vand.u32 %v1444, 4294901760
        %1446 = vmatmul.mubr.f32.gmra.mxu0 %v1445
        %v1447 = vpop.f32.mrf.mxu0
        %v1448 = vadd.f32 %v1138, %v1447
        %v1449 = vpop.f32.mrf.mxu0
        %1450 = vmatprep.mubr.f32.mxu0 0.0
        %v1451 = vand.u32 %v221, 4294901760
        %v1452 = vsub.f32 %v221, %v1451
        %v1453 = vand.u32 %v1452, 4294901760
        %1454 = vmatmul.mubr.f32.gmra.mxu0 %v1453
        %v1455 = vpop.f32.mrf.mxu0
        %v1456 = vadd.f32 %v1145, %v1455
        %v1457 = vpop.f32.mrf.mxu0
        %1458 = vmatprep.mubr.f32.mxu0 0.0
        %v1459 = vand.u32 %v222, 4294901760
        %v1460 = vsub.f32 %v222, %v1459
        %v1461 = vand.u32 %v1460, 4294901760
        %1462 = vmatmul.mubr.f32.gmra.mxu0 %v1461
        %v1463 = vpop.f32.mrf.mxu0
        %v1464 = vadd.f32 %v1152, %v1463
        %v1465 = vpop.f32.mrf.mxu0
        %1466 = vmatprep.mubr.f32.mxu0 0.0
        %v1467 = vand.u32 %v223, 4294901760
        %v1468 = vsub.f32 %v223, %v1467
        %v1469 = vand.u32 %v1468, 4294901760
        %1470 = vmatmul.mubr.f32.gmra.mxu0 %v1469
        %v1471 = vpop.f32.mrf.mxu0
        %v1472 = vadd.f32 %v1159, %v1471
        %v1473 = vpop.f32.mrf.mxu0
        %1474 = vmatprep.mubr.f32.mxu0 0.0
        %v1475 = vand.u32 %v224, 4294901760
        %v1476 = vsub.f32 %v224, %v1475
        %v1477 = vand.u32 %v1476, 4294901760
        %1478 = vmatmul.mubr.f32.gmra.mxu0 %v1477
        %v1479 = vpop.f32.mrf.mxu0
        %v1480 = vadd.f32 %v1166, %v1479
        %v1481 = vpop.f32.mrf.mxu0
        %1482 = vmatprep.mubr.f32.mxu0 0.0
        %v1483 = vand.u32 %v225, 4294901760
        %v1484 = vsub.f32 %v225, %v1483
        %v1485 = vand.u32 %v1484, 4294901760
        %1486 = vmatmul.mubr.f32.gmra.mxu0 %v1485
        %v1487 = vpop.f32.mrf.mxu0
        %v1488 = vadd.f32 %v1173, %v1487
        %v1489 = vpop.f32.mrf.mxu0
        %1490 = vmatprep.mubr.f32.mxu0 0.0
        %v1491 = vand.u32 %v226, 4294901760
        %v1492 = vsub.f32 %v226, %v1491
        %v1493 = vand.u32 %v1492, 4294901760
        %1494 = vmatmul.mubr.f32.gmra.mxu0 %v1493
        %v1495 = vpop.f32.mrf.mxu0
        %v1496 = vadd.f32 %v1180, %v1495
        %v1497 = vpop.f32.mrf.mxu0
        %1498 = vmatprep.mubr.f32.mxu0 0.0
        %v1499 = vand.u32 %v227, 4294901760
        %v1500 = vsub.f32 %v227, %v1499
        %v1501 = vand.u32 %v1500, 4294901760
        %1502 = vmatmul.mubr.f32.gmra.mxu0 %v1501
        %v1503 = vpop.f32.mrf.mxu0
        %v1504 = vadd.f32 %v1187, %v1503
        %v1505 = vpop.f32.mrf.mxu0
        %1506 = vmatprep.mubr.f32.mxu0 0.0
        %v1507 = vand.u32 %v228, 4294901760
        %v1508 = vsub.f32 %v228, %v1507
        %v1509 = vand.u32 %v1508, 4294901760
        %1510 = vmatmul.mubr.f32.gmra.mxu0 %v1509
        %v1511 = vpop.f32.mrf.mxu0
        %v1512 = vadd.f32 %v1194, %v1511
        %v1513 = vpop.f32.mrf.mxu0
        %1514 = vmatprep.mubr.f32.mxu0 0.0
        %v1515 = vand.u32 %v229, 4294901760
        %v1516 = vsub.f32 %v229, %v1515
        %v1517 = vand.u32 %v1516, 4294901760
        %1518 = vmatmul.mubr.f32.gmra.mxu0 %v1517
        %v1519 = vpop.f32.mrf.mxu0
        %v1520 = vadd.f32 %v1201, %v1519
        %v1521 = vpop.f32.mrf.mxu0
        %1522 = vmatprep.mubr.f32.mxu0 0.0
        %v1523 = vand.u32 %v230, 4294901760
        %v1524 = vsub.f32 %v230, %v1523
        %v1525 = vand.u32 %v1524, 4294901760
        %1526 = vmatmul.mubr.f32.gmra.mxu0 %v1525
        %v1527 = vpop.f32.mrf.mxu0
        %v1528 = vadd.f32 %v1208, %v1527
        %v1529 = vpop.f32.mrf.mxu0
        %1530 = vmatprep.mubr.f32.mxu0 0.0
        %v1531 = vand.u32 %v231, 4294901760
        %v1532 = vsub.f32 %v231, %v1531
        %v1533 = vand.u32 %v1532, 4294901760
        %1534 = vmatmul.mubr.f32.gmra.mxu0 %v1533
        %v1535 = vpop.f32.mrf.mxu0
        %v1536 = vadd.f32 %v1215, %v1535
        %v1537 = vpop.f32.mrf.mxu0
        %1538 = vmatprep.mubr.f32.mxu0 0.0
        %v1539 = vand.u32 %v232, 4294901760
        %v1540 = vsub.f32 %v232, %v1539
        %v1541 = vand.u32 %v1540, 4294901760
        %1542 = vmatmul.mubr.f32.gmra.mxu0 %v1541
        %v1543 = vpop.f32.mrf.mxu0
        %v1544 = vadd.f32 %v1222, %v1543
        %v1545 = vpop.f32.mrf.mxu0
        %1546 = vmatprep.mubr.f32.mxu0 0.0
        %v1547 = vand.u32 %v233, 4294901760
        %v1548 = vsub.f32 %v233, %v1547
        %v1549 = vand.u32 %v1548, 4294901760
        %1550 = vmatmul.mubr.f32.gmra.mxu0 %v1549
        %v1551 = vpop.f32.mrf.mxu0
        %v1552 = vadd.f32 %v1229, %v1551
        %v1553 = vpop.f32.mrf.mxu0
        %1554 = vmatprep.mubr.f32.mxu0 0.0
        %v1555 = vand.u32 %v234, 4294901760
        %v1556 = vsub.f32 %v234, %v1555
        %v1557 = vand.u32 %v1556, 4294901760
        %1558 = vmatmul.mubr.f32.gmra.mxu0 %v1557
        %v1559 = vpop.f32.mrf.mxu0
        %v1560 = vadd.f32 %v1236, %v1559
        %v1561 = vpop.f32.mrf.mxu0
        %1562 = vmatprep.mubr.f32.mxu0 0.0
        %v1563 = vand.u32 %v235, 4294901760
        %v1564 = vsub.f32 %v235, %v1563
        %v1565 = vand.u32 %v1564, 4294901760
        %1566 = vmatmul.mubr.f32.gmra.mxu0 %v1565
        %v1567 = vpop.f32.mrf.mxu0
        %v1568 = vadd.f32 %v1243, %v1567
        %v1569 = vpop.f32.mrf.mxu0
        %1570 = vmatprep.mubr.f32.mxu0 0.0
        %v1571 = vand.u32 %v236, 4294901760
        %v1572 = vsub.f32 %v236, %v1571
        %v1573 = vand.u32 %v1572, 4294901760
        %1574 = vmatmul.mubr.f32.gmra.mxu0 %v1573
        %v1575 = vpop.f32.mrf.mxu0
        %v1576 = vadd.f32 %v1250, %v1575
        %v1577 = vpop.f32.mrf.mxu0
        %1578 = vmatprep.mubr.f32.mxu0 0.0
        %v1579 = vand.u32 %v237, 4294901760
        %v1580 = vsub.f32 %v237, %v1579
        %v1581 = vand.u32 %v1580, 4294901760
        %1582 = vmatmul.mubr.f32.gmra.mxu0 %v1581
        %v1583 = vpop.f32.mrf.mxu0
        %v1584 = vadd.f32 %v1257, %v1583
        %v1585 = vpop.f32.mrf.mxu0
        %1586 = vmatprep.mubr.f32.mxu0 0.0
        %v1587 = vand.u32 %v238, 4294901760
        %v1588 = vsub.f32 %v238, %v1587
        %v1589 = vand.u32 %v1588, 4294901760
        %1590 = vmatmul.mubr.f32.gmra.mxu0 %v1589
        %v1591 = vpop.f32.mrf.mxu0
        %v1592 = vadd.f32 %v1264, %v1591
        %v1593 = vpop.f32.mrf.mxu0
        %1594 = vmatprep.mubr.f32.mxu0 0.0
        %v1595 = vand.u32 %v239, 4294901760
        %v1596 = vsub.f32 %v239, %v1595
        %v1597 = vand.u32 %v1596, 4294901760
        %1598 = vmatmul.mubr.f32.gmra.mxu0 %v1597
        %v1599 = vpop.f32.mrf.mxu0
        %v1600 = vadd.f32 %v1271, %v1599
        %v1601 = vpop.f32.mrf.mxu0
        %1602 = vmatprep.mubr.f32.mxu0 0.0
        %v1603 = vand.u32 %v240, 4294901760
        %v1604 = vsub.f32 %v240, %v1603
        %v1605 = vand.u32 %v1604, 4294901760
        %1606 = vmatmul.mubr.f32.gmra.mxu0 %v1605
        %v1607 = vpop.f32.mrf.mxu0
        %v1608 = vadd.f32 %v1278, %v1607
        %v1609 = vpop.f32.mrf.mxu0
        %1610 = vmatprep.mubr.f32.mxu0 0.0
        %v1611 = vand.u32 %v241, 4294901760
        %v1612 = vsub.f32 %v241, %v1611
        %v1613 = vand.u32 %v1612, 4294901760
        %1614 = vmatmul.mubr.f32.gmra.mxu0 %v1613
        %v1615 = vpop.f32.mrf.mxu0
        %v1616 = vadd.f32 %v1285, %v1615
        %v1617 = vpop.f32.mrf.mxu0
        %1618 = vmatprep.mubr.f32.mxu0 0.0
        %v1619 = vand.u32 %v242, 4294901760
        %v1620 = vsub.f32 %v242, %v1619
        %v1621 = vand.u32 %v1620, 4294901760
        %1622 = vmatmul.mubr.f32.gmra.mxu0 %v1621
        %v1623 = vpop.f32.mrf.mxu0
        %v1624 = vadd.f32 %v1292, %v1623
        %v1625 = vpop.f32.mrf.mxu0
        %1626 = vmatprep.mubr.f32.mxu0 0.0
        %v1627 = vand.u32 %v243, 4294901760
        %v1628 = vsub.f32 %v243, %v1627
        %v1629 = vand.u32 %v1628, 4294901760
        %1630 = vmatmul.mubr.f32.gmra.mxu0 %v1629
        %v1631 = vpop.f32.mrf.mxu0
        %v1632 = vadd.f32 %v1299, %v1631
        %v1633 = vpop.f32.mrf.mxu0
        %1634 = vmatprep.mubr.f32.mxu0 0.0
        %v1635 = vand.u32 %v244, 4294901760
        %v1636 = vsub.f32 %v244, %v1635
        %v1637 = vand.u32 %v1636, 4294901760
        %1638 = vmatmul.mubr.f32.gmra.mxu0 %v1637
        %v1639 = vpop.f32.mrf.mxu0
        %v1640 = vadd.f32 %v1306, %v1639
        %v1641 = vpop.f32.mrf.mxu0
        %1642 = vmatprep.mubr.f32.mxu0 0.0
        %v1643 = vand.u32 %v245, 4294901760
        %v1644 = vsub.f32 %v245, %v1643
        %v1645 = vand.u32 %v1644, 4294901760
        %1646 = vmatmul.mubr.f32.gmra.mxu0 %v1645
        %v1647 = vpop.f32.mrf.mxu0
        %v1648 = vadd.f32 %v1313, %v1647
        %v1649 = vpop.f32.mrf.mxu0
        %1650 = vmatprep.mubr.f32.mxu0 0.0
        %v1651 = vand.u32 %v246, 4294901760
        %v1652 = vsub.f32 %v246, %v1651
        %v1653 = vand.u32 %v1652, 4294901760
        %1654 = vmatmul.mubr.f32.gmra.mxu0 %v1653
        %v1655 = vpop.f32.mrf.mxu0
        %v1656 = vadd.f32 %v1320, %v1655
        %v1657 = vpop.f32.mrf.mxu0
        %1658 = vmatprep.mubr.f32.mxu0 0.0
        %v1659 = vand.u32 %v247, 4294901760
        %v1660 = vsub.f32 %v247, %v1659
        %v1661 = vand.u32 %v1660, 4294901760
        %1662 = vmatmul.mubr.f32.gmra.mxu0 %v1661
        %v1663 = vpop.f32.mrf.mxu0
        %v1664 = vadd.f32 %v1327, %v1663
        %v1665 = vpop.f32.mrf.mxu0
        %1666 = vdwg.mxu0
        %1667 = vmatprep.subr.mxu0 0.0
        %v1668 = vand.u32 %v263, 4294901760
        %v1669 = vsub.f32 %v263, %v1668
        %v1670 = vand.u32 %v1669, 4294901760
        %1671 = vmatpush1.msra.mxu0 %v1670
        %1672 = vmatprep.subr.mxu0 0.0
        %v1673 = vand.u32 %v262, 4294901760
        %v1674 = vsub.f32 %v262, %v1673
        %v1675 = vand.u32 %v1674, 4294901760
        %1676 = vmatpush1.msra.mxu0 %v1675
        %1677 = vmatprep.subr.mxu0 0.0
        %v1678 = vand.u32 %v261, 4294901760
        %v1679 = vsub.f32 %v261, %v1678
        %v1680 = vand.u32 %v1679, 4294901760
        %1681 = vmatpush1.msra.mxu0 %v1680
        %1682 = vmatprep.subr.mxu0 0.0
        %v1683 = vand.u32 %v260, 4294901760
        %v1684 = vsub.f32 %v260, %v1683
        %v1685 = vand.u32 %v1684, 4294901760
        %1686 = vmatpush1.msra.mxu0 %v1685
        %1687 = vmatprep.subr.mxu0 0.0
        %v1688 = vand.u32 %v259, 4294901760
        %v1689 = vsub.f32 %v259, %v1688
        %v1690 = vand.u32 %v1689, 4294901760
        %1691 = vmatpush1.msra.mxu0 %v1690
        %1692 = vmatprep.subr.mxu0 0.0
        %v1693 = vand.u32 %v258, 4294901760
        %v1694 = vsub.f32 %v258, %v1693
        %v1695 = vand.u32 %v1694, 4294901760
        %1696 = vmatpush1.msra.mxu0 %v1695
        %1697 = vmatprep.subr.mxu0 0.0
        %v1698 = vand.u32 %v257, 4294901760
        %v1699 = vsub.f32 %v257, %v1698
        %v1700 = vand.u32 %v1699, 4294901760
        %1701 = vmatpush1.msra.mxu0 %v1700
        %1702 = vmatprep.subr.mxu0 0.0
        %v1703 = vand.u32 %v256, 4294901760
        %v1704 = vsub.f32 %v256, %v1703
        %v1705 = vand.u32 %v1704, 4294901760
        %1706 = vmatpush1.msra.mxu0 %v1705
        %1707 = vmatprep.subr.mxu0 0.0
        %v1708 = vand.u32 %v255, 4294901760
        %v1709 = vsub.f32 %v255, %v1708
        %v1710 = vand.u32 %v1709, 4294901760
        %1711 = vmatpush1.msra.mxu0 %v1710
        %1712 = vmatprep.subr.mxu0 0.0
        %v1713 = vand.u32 %v254, 4294901760
        %v1714 = vsub.f32 %v254, %v1713
        %v1715 = vand.u32 %v1714, 4294901760
        %1716 = vmatpush1.msra.mxu0 %v1715
        %1717 = vmatprep.subr.mxu0 0.0
        %v1718 = vand.u32 %v253, 4294901760
        %v1719 = vsub.f32 %v253, %v1718
        %v1720 = vand.u32 %v1719, 4294901760
        %1721 = vmatpush1.msra.mxu0 %v1720
        %1722 = vmatprep.subr.mxu0 0.0
        %v1723 = vand.u32 %v252, 4294901760
        %v1724 = vsub.f32 %v252, %v1723
        %v1725 = vand.u32 %v1724, 4294901760
        %1726 = vmatpush1.msra.mxu0 %v1725
        %1727 = vmatprep.subr.mxu0 0.0
        %v1728 = vand.u32 %v251, 4294901760
        %v1729 = vsub.f32 %v251, %v1728
        %v1730 = vand.u32 %v1729, 4294901760
        %1731 = vmatpush1.msra.mxu0 %v1730
        %1732 = vmatprep.subr.mxu0 0.0
        %v1733 = vand.u32 %v250, 4294901760
        %v1734 = vsub.f32 %v250, %v1733
        %v1735 = vand.u32 %v1734, 4294901760
        %1736 = vmatpush1.msra.mxu0 %v1735
        %1737 = vmatprep.subr.mxu0 0.0
        %v1738 = vand.u32 %v249, 4294901760
        %v1739 = vsub.f32 %v249, %v1738
        %v1740 = vand.u32 %v1739, 4294901760
        %1741 = vmatpush1.msra.mxu0 %v1740
        %1742 = vmatprep.subr.mxu0 0.0
        %v1743 = vand.u32 %v248, 4294901760
        %v1744 = vsub.f32 %v248, %v1743
        %v1745 = vand.u32 %v1744, 4294901760
        %1746 = vmatpush1.msra.mxu0 %v1745
        %1747 = vmatprep.subr.mxu0 0.0
        %1748 = vmatpush2.msra.mxu0 0.0
        %1749 = vmatprep.subr.mxu0 0.0
        %1750 = vmatpush2.msra.mxu0 0.0
        %1751 = vmatprep.subr.mxu0 0.0
        %1752 = vmatpush2.msra.mxu0 0.0
        %1753 = vmatprep.subr.mxu0 0.0
        %1754 = vmatpush2.msra.mxu0 0.0
        %1755 = vmatprep.subr.mxu0 0.0
        %1756 = vmatpush2.msra.mxu0 0.0
        %1757 = vmatprep.subr.mxu0 0.0
        %1758 = vmatpush2.msra.mxu0 0.0
        %1759 = vmatprep.subr.mxu0 0.0
        %1760 = vmatpush2.msra.mxu0 0.0
        %1761 = vmatprep.subr.mxu0 0.0
        %1762 = vmatpush2.msra.mxu0 0.0
        %1763 = vmatprep.subr.mxu0 0.0
        %1764 = vmatpush2.msra.mxu0 0.0
        %1765 = vmatprep.subr.mxu0 0.0
        %1766 = vmatpush2.msra.mxu0 0.0
        %1767 = vmatprep.subr.mxu0 0.0
        %1768 = vmatpush2.msra.mxu0 0.0
        %1769 = vmatprep.subr.mxu0 0.0
        %1770 = vmatpush2.msra.mxu0 0.0
        %1771 = vmatprep.subr.mxu0 0.0
        %1772 = vmatpush2.msra.mxu0 0.0
        %1773 = vmatprep.subr.mxu0 0.0
        %1774 = vmatpush2.msra.mxu0 0.0
        %1775 = vmatprep.subr.mxu0 0.0
        %1776 = vmatpush2.msra.mxu0 0.0
        %1777 = vmatprep.subr.mxu0 0.0
        %1778 = vmatpush2.msra.mxu0 0.0
        %1779 = vmatprep.mubr.f32.mxu0 0.0
        %v1780 = vand.u32 %v216, 4294901760
        %1781 = vmatmul.mubr.f32.gmra.mxu0 %v1780
        %v1782 = vpop.f32.mrf.mxu0
        %v1783 = vadd.f32 %v1416, %v1782
        %v1784 = vpop.f32.mrf.mxu0
        %1785 = vmatprep.mubr.f32.mxu0 0.0
        %v1786 = vand.u32 %v217, 4294901760
        %1787 = vmatmul.mubr.f32.gmra.mxu0 %v1786
        %v1788 = vpop.f32.mrf.mxu0
        %v1789 = vadd.f32 %v1424, %v1788
        %v1790 = vpop.f32.mrf.mxu0
        %1791 = vmatprep.mubr.f32.mxu0 0.0
        %v1792 = vand.u32 %v218, 4294901760
        %1793 = vmatmul.mubr.f32.gmra.mxu0 %v1792
        %v1794 = vpop.f32.mrf.mxu0
        %v1795 = vadd.f32 %v1432, %v1794
        %v1796 = vpop.f32.mrf.mxu0
        %1797 = vmatprep.mubr.f32.mxu0 0.0
        %v1798 = vand.u32 %v219, 4294901760
        %1799 = vmatmul.mubr.f32.gmra.mxu0 %v1798
        %v1800 = vpop.f32.mrf.mxu0
        %v1801 = vadd.f32 %v1440, %v1800
        %v1802 = vpop.f32.mrf.mxu0
        %1803 = vmatprep.mubr.f32.mxu0 0.0
        %v1804 = vand.u32 %v220, 4294901760
        %1805 = vmatmul.mubr.f32.gmra.mxu0 %v1804
        %v1806 = vpop.f32.mrf.mxu0
        %v1807 = vadd.f32 %v1448, %v1806
        %v1808 = vpop.f32.mrf.mxu0
        %1809 = vmatprep.mubr.f32.mxu0 0.0
        %v1810 = vand.u32 %v221, 4294901760
        %1811 = vmatmul.mubr.f32.gmra.mxu0 %v1810
        %v1812 = vpop.f32.mrf.mxu0
        %v1813 = vadd.f32 %v1456, %v1812
        %v1814 = vpop.f32.mrf.mxu0
        %1815 = vmatprep.mubr.f32.mxu0 0.0
        %v1816 = vand.u32 %v222, 4294901760
        %1817 = vmatmul.mubr.f32.gmra.mxu0 %v1816
        %v1818 = vpop.f32.mrf.mxu0
        %v1819 = vadd.f32 %v1464, %v1818
        %v1820 = vpop.f32.mrf.mxu0
        %1821 = vmatprep.mubr.f32.mxu0 0.0
        %v1822 = vand.u32 %v223, 4294901760
        %1823 = vmatmul.mubr.f32.gmra.mxu0 %v1822
        %v1824 = vpop.f32.mrf.mxu0
        %v1825 = vadd.f32 %v1472, %v1824
        %v1826 = vpop.f32.mrf.mxu0
        %1827 = vmatprep.mubr.f32.mxu0 0.0
        %v1828 = vand.u32 %v224, 4294901760
        %1829 = vmatmul.mubr.f32.gmra.mxu0 %v1828
        %v1830 = vpop.f32.mrf.mxu0
        %v1831 = vadd.f32 %v1480, %v1830
        %v1832 = vpop.f32.mrf.mxu0
        %1833 = vmatprep.mubr.f32.mxu0 0.0
        %v1834 = vand.u32 %v225, 4294901760
        %1835 = vmatmul.mubr.f32.gmra.mxu0 %v1834
        %v1836 = vpop.f32.mrf.mxu0
        %v1837 = vadd.f32 %v1488, %v1836
        %v1838 = vpop.f32.mrf.mxu0
        %1839 = vmatprep.mubr.f32.mxu0 0.0
        %v1840 = vand.u32 %v226, 4294901760
        %1841 = vmatmul.mubr.f32.gmra.mxu0 %v1840
        %v1842 = vpop.f32.mrf.mxu0
        %v1843 = vadd.f32 %v1496, %v1842
        %v1844 = vpop.f32.mrf.mxu0
        %1845 = vmatprep.mubr.f32.mxu0 0.0
        %v1846 = vand.u32 %v227, 4294901760
        %1847 = vmatmul.mubr.f32.gmra.mxu0 %v1846
        %v1848 = vpop.f32.mrf.mxu0
        %v1849 = vadd.f32 %v1504, %v1848
        %v1850 = vpop.f32.mrf.mxu0
        %1851 = vmatprep.mubr.f32.mxu0 0.0
        %v1852 = vand.u32 %v228, 4294901760
        %1853 = vmatmul.mubr.f32.gmra.mxu0 %v1852
        %v1854 = vpop.f32.mrf.mxu0
        %v1855 = vadd.f32 %v1512, %v1854
        %v1856 = vpop.f32.mrf.mxu0
        %1857 = vmatprep.mubr.f32.mxu0 0.0
        %v1858 = vand.u32 %v229, 4294901760
        %1859 = vmatmul.mubr.f32.gmra.mxu0 %v1858
        %v1860 = vpop.f32.mrf.mxu0
        %v1861 = vadd.f32 %v1520, %v1860
        %v1862 = vpop.f32.mrf.mxu0
        %1863 = vmatprep.mubr.f32.mxu0 0.0
        %v1864 = vand.u32 %v230, 4294901760
        %1865 = vmatmul.mubr.f32.gmra.mxu0 %v1864
        %v1866 = vpop.f32.mrf.mxu0
        %v1867 = vadd.f32 %v1528, %v1866
        %v1868 = vpop.f32.mrf.mxu0
        %1869 = vmatprep.mubr.f32.mxu0 0.0
        %v1870 = vand.u32 %v231, 4294901760
        %1871 = vmatmul.mubr.f32.gmra.mxu0 %v1870
        %v1872 = vpop.f32.mrf.mxu0
        %v1873 = vadd.f32 %v1536, %v1872
        %v1874 = vpop.f32.mrf.mxu0
        %1875 = vmatprep.mubr.f32.mxu0 0.0
        %v1876 = vand.u32 %v232, 4294901760
        %1877 = vmatmul.mubr.f32.gmra.mxu0 %v1876
        %v1878 = vpop.f32.mrf.mxu0
        %v1879 = vadd.f32 %v1544, %v1878
        %v1880 = vpop.f32.mrf.mxu0
        %1881 = vmatprep.mubr.f32.mxu0 0.0
        %v1882 = vand.u32 %v233, 4294901760
        %1883 = vmatmul.mubr.f32.gmra.mxu0 %v1882
        %v1884 = vpop.f32.mrf.mxu0
        %v1885 = vadd.f32 %v1552, %v1884
        %v1886 = vpop.f32.mrf.mxu0
        %1887 = vmatprep.mubr.f32.mxu0 0.0
        %v1888 = vand.u32 %v234, 4294901760
        %1889 = vmatmul.mubr.f32.gmra.mxu0 %v1888
        %v1890 = vpop.f32.mrf.mxu0
        %v1891 = vadd.f32 %v1560, %v1890
        %v1892 = vpop.f32.mrf.mxu0
        %1893 = vmatprep.mubr.f32.mxu0 0.0
        %v1894 = vand.u32 %v235, 4294901760
        %1895 = vmatmul.mubr.f32.gmra.mxu0 %v1894
        %v1896 = vpop.f32.mrf.mxu0
        %v1897 = vadd.f32 %v1568, %v1896
        %v1898 = vpop.f32.mrf.mxu0
        %1899 = vmatprep.mubr.f32.mxu0 0.0
        %v1900 = vand.u32 %v236, 4294901760
        %1901 = vmatmul.mubr.f32.gmra.mxu0 %v1900
        %v1902 = vpop.f32.mrf.mxu0
        %v1903 = vadd.f32 %v1576, %v1902
        %v1904 = vpop.f32.mrf.mxu0
        %1905 = vmatprep.mubr.f32.mxu0 0.0
        %v1906 = vand.u32 %v237, 4294901760
        %1907 = vmatmul.mubr.f32.gmra.mxu0 %v1906
        %v1908 = vpop.f32.mrf.mxu0
        %v1909 = vadd.f32 %v1584, %v1908
        %v1910 = vpop.f32.mrf.mxu0
        %1911 = vmatprep.mubr.f32.mxu0 0.0
        %v1912 = vand.u32 %v238, 4294901760
        %1913 = vmatmul.mubr.f32.gmra.mxu0 %v1912
        %v1914 = vpop.f32.mrf.mxu0
        %v1915 = vadd.f32 %v1592, %v1914
        %v1916 = vpop.f32.mrf.mxu0
        %1917 = vmatprep.mubr.f32.mxu0 0.0
        %v1918 = vand.u32 %v239, 4294901760
        %1919 = vmatmul.mubr.f32.gmra.mxu0 %v1918
        %v1920 = vpop.f32.mrf.mxu0
        %v1921 = vadd.f32 %v1600, %v1920
        %v1922 = vpop.f32.mrf.mxu0
        %1923 = vmatprep.mubr.f32.mxu0 0.0
        %v1924 = vand.u32 %v240, 4294901760
        %1925 = vmatmul.mubr.f32.gmra.mxu0 %v1924
        %v1926 = vpop.f32.mrf.mxu0
        %v1927 = vadd.f32 %v1608, %v1926
        %v1928 = vpop.f32.mrf.mxu0
        %1929 = vmatprep.mubr.f32.mxu0 0.0
        %v1930 = vand.u32 %v241, 4294901760
        %1931 = vmatmul.mubr.f32.gmra.mxu0 %v1930
        %v1932 = vpop.f32.mrf.mxu0
        %v1933 = vadd.f32 %v1616, %v1932
        %v1934 = vpop.f32.mrf.mxu0
        %1935 = vmatprep.mubr.f32.mxu0 0.0
        %v1936 = vand.u32 %v242, 4294901760
        %1937 = vmatmul.mubr.f32.gmra.mxu0 %v1936
        %v1938 = vpop.f32.mrf.mxu0
        %v1939 = vadd.f32 %v1624, %v1938
        %v1940 = vpop.f32.mrf.mxu0
        %1941 = vmatprep.mubr.f32.mxu0 0.0
        %v1942 = vand.u32 %v243, 4294901760
        %1943 = vmatmul.mubr.f32.gmra.mxu0 %v1942
        %v1944 = vpop.f32.mrf.mxu0
        %v1945 = vadd.f32 %v1632, %v1944
        %v1946 = vpop.f32.mrf.mxu0
        %1947 = vmatprep.mubr.f32.mxu0 0.0
        %v1948 = vand.u32 %v244, 4294901760
        %1949 = vmatmul.mubr.f32.gmra.mxu0 %v1948
        %v1950 = vpop.f32.mrf.mxu0
        %v1951 = vadd.f32 %v1640, %v1950
        %v1952 = vpop.f32.mrf.mxu0
        %1953 = vmatprep.mubr.f32.mxu0 0.0
        %v1954 = vand.u32 %v245, 4294901760
        %1955 = vmatmul.mubr.f32.gmra.mxu0 %v1954
        %v1956 = vpop.f32.mrf.mxu0
        %v1957 = vadd.f32 %v1648, %v1956
        %v1958 = vpop.f32.mrf.mxu0
        %1959 = vmatprep.mubr.f32.mxu0 0.0
        %v1960 = vand.u32 %v246, 4294901760
        %1961 = vmatmul.mubr.f32.gmra.mxu0 %v1960
        %v1962 = vpop.f32.mrf.mxu0
        %v1963 = vadd.f32 %v1656, %v1962
        %v1964 = vpop.f32.mrf.mxu0
        %1965 = vmatprep.mubr.f32.mxu0 0.0
        %v1966 = vand.u32 %v247, 4294901760
        %1967 = vmatmul.mubr.f32.gmra.mxu0 %v1966
        %v1968 = vpop.f32.mrf.mxu0
        %v1969 = vadd.f32 %v1664, %v1968
        %v1970 = vpop.f32.mrf.mxu0
        %1971 = vdwg.mxu0
        %1972 = vmatprep.subr.mxu0 0.0
        %v1973 = vand.u32 %v263, 4294901760
        %1974 = vmatpush1.msra.mxu0 %v1973
        %1975 = vmatprep.subr.mxu0 0.0
        %v1976 = vand.u32 %v262, 4294901760
        %1977 = vmatpush1.msra.mxu0 %v1976
        %1978 = vmatprep.subr.mxu0 0.0
        %v1979 = vand.u32 %v261, 4294901760
        %1980 = vmatpush1.msra.mxu0 %v1979
        %1981 = vmatprep.subr.mxu0 0.0
        %v1982 = vand.u32 %v260, 4294901760
        %1983 = vmatpush1.msra.mxu0 %v1982
        %1984 = vmatprep.subr.mxu0 0.0
        %v1985 = vand.u32 %v259, 4294901760
        %1986 = vmatpush1.msra.mxu0 %v1985
        %1987 = vmatprep.subr.mxu0 0.0
        %v1988 = vand.u32 %v258, 4294901760
        %1989 = vmatpush1.msra.mxu0 %v1988
        %1990 = vmatprep.subr.mxu0 0.0
        %v1991 = vand.u32 %v257, 4294901760
        %1992 = vmatpush1.msra.mxu0 %v1991
        %1993 = vmatprep.subr.mxu0 0.0
        %v1994 = vand.u32 %v256, 4294901760
        %1995 = vmatpush1.msra.mxu0 %v1994
        %1996 = vmatprep.subr.mxu0 0.0
        %v1997 = vand.u32 %v255, 4294901760
        %1998 = vmatpush1.msra.mxu0 %v1997
        %1999 = vmatprep.subr.mxu0 0.0
        %v2000 = vand.u32 %v254, 4294901760
        %2001 = vmatpush1.msra.mxu0 %v2000
        %2002 = vmatprep.subr.mxu0 0.0
        %v2003 = vand.u32 %v253, 4294901760
        %2004 = vmatpush1.msra.mxu0 %v2003
        %2005 = vmatprep.subr.mxu0 0.0
        %v2006 = vand.u32 %v252, 4294901760
        %2007 = vmatpush1.msra.mxu0 %v2006
        %2008 = vmatprep.subr.mxu0 0.0
        %v2009 = vand.u32 %v251, 4294901760
        %2010 = vmatpush1.msra.mxu0 %v2009
        %2011 = vmatprep.subr.mxu0 0.0
        %v2012 = vand.u32 %v250, 4294901760
        %2013 = vmatpush1.msra.mxu0 %v2012
        %2014 = vmatprep.subr.mxu0 0.0
        %v2015 = vand.u32 %v249, 4294901760
        %2016 = vmatpush1.msra.mxu0 %v2015
        %2017 = vmatprep.subr.mxu0 0.0
        %v2018 = vand.u32 %v248, 4294901760
        %2019 = vmatpush1.msra.mxu0 %v2018
        %2020 = vmatprep.subr.mxu0 0.0
        %2021 = vmatpush2.msra.mxu0 0.0
        %2022 = vmatprep.subr.mxu0 0.0
        %2023 = vmatpush2.msra.mxu0 0.0
        %2024 = vmatprep.subr.mxu0 0.0
        %2025 = vmatpush2.msra.mxu0 0.0
        %2026 = vmatprep.subr.mxu0 0.0
        %2027 = vmatpush2.msra.mxu0 0.0
        %2028 = vmatprep.subr.mxu0 0.0
        %2029 = vmatpush2.msra.mxu0 0.0
        %2030 = vmatprep.subr.mxu0 0.0
        %2031 = vmatpush2.msra.mxu0 0.0
        %2032 = vmatprep.subr.mxu0 0.0
        %2033 = vmatpush2.msra.mxu0 0.0
        %2034 = vmatprep.subr.mxu0 0.0
        %2035 = vmatpush2.msra.mxu0 0.0
        %2036 = vmatprep.subr.mxu0 0.0
        %2037 = vmatpush2.msra.mxu0 0.0
        %2038 = vmatprep.subr.mxu0 0.0
        %2039 = vmatpush2.msra.mxu0 0.0
        %2040 = vmatprep.subr.mxu0 0.0
        %2041 = vmatpush2.msra.mxu0 0.0
        %2042 = vmatprep.subr.mxu0 0.0
        %2043 = vmatpush2.msra.mxu0 0.0
        %2044 = vmatprep.subr.mxu0 0.0
        %2045 = vmatpush2.msra.mxu0 0.0
        %2046 = vmatprep.subr.mxu0 0.0
        %2047 = vmatpush2.msra.mxu0 0.0
        %2048 = vmatprep.subr.mxu0 0.0
        %2049 = vmatpush2.msra.mxu0 0.0
        %2050 = vmatprep.subr.mxu0 0.0
        %2051 = vmatpush2.msra.mxu0 0.0
        %2052 = vmatprep.mubr.f32.mxu0 0.0
        %v2053 = vand.u32 %v216, 4294901760
        %2054 = vmatmul.mubr.f32.gmra.mxu0 %v2053
        %v2055 = vpop.f32.mrf.mxu0
        %v2056 = vadd.f32 %v1783, %v2055
        %v2057 = vpop.f32.mrf.mxu0
        %2058 = vmatprep.mubr.f32.mxu0 0.0
        %v2059 = vand.u32 %v217, 4294901760
        %2060 = vmatmul.mubr.f32.gmra.mxu0 %v2059
        %v2061 = vpop.f32.mrf.mxu0
        %v2062 = vadd.f32 %v1789, %v2061
        %v2063 = vpop.f32.mrf.mxu0
        %2064 = vmatprep.mubr.f32.mxu0 0.0
        %v2065 = vand.u32 %v218, 4294901760
        %2066 = vmatmul.mubr.f32.gmra.mxu0 %v2065
        %v2067 = vpop.f32.mrf.mxu0
        %v2068 = vadd.f32 %v1795, %v2067
        %v2069 = vpop.f32.mrf.mxu0
        %2070 = vmatprep.mubr.f32.mxu0 0.0
        %v2071 = vand.u32 %v219, 4294901760
        %2072 = vmatmul.mubr.f32.gmra.mxu0 %v2071
        %v2073 = vpop.f32.mrf.mxu0
        %v2074 = vadd.f32 %v1801, %v2073
        %v2075 = vpop.f32.mrf.mxu0
        %2076 = vmatprep.mubr.f32.mxu0 0.0
        %v2077 = vand.u32 %v220, 4294901760
        %2078 = vmatmul.mubr.f32.gmra.mxu0 %v2077
        %v2079 = vpop.f32.mrf.mxu0
        %v2080 = vadd.f32 %v1807, %v2079
        %v2081 = vpop.f32.mrf.mxu0
        %2082 = vmatprep.mubr.f32.mxu0 0.0
        %v2083 = vand.u32 %v221, 4294901760
        %2084 = vmatmul.mubr.f32.gmra.mxu0 %v2083
        %v2085 = vpop.f32.mrf.mxu0
        %v2086 = vadd.f32 %v1813, %v2085
        %v2087 = vpop.f32.mrf.mxu0
        %2088 = vmatprep.mubr.f32.mxu0 0.0
        %v2089 = vand.u32 %v222, 4294901760
        %2090 = vmatmul.mubr.f32.gmra.mxu0 %v2089
        %v2091 = vpop.f32.mrf.mxu0
        %v2092 = vadd.f32 %v1819, %v2091
        %v2093 = vpop.f32.mrf.mxu0
        %2094 = vmatprep.mubr.f32.mxu0 0.0
        %v2095 = vand.u32 %v223, 4294901760
        %2096 = vmatmul.mubr.f32.gmra.mxu0 %v2095
        %v2097 = vpop.f32.mrf.mxu0
        %v2098 = vadd.f32 %v1825, %v2097
        %v2099 = vpop.f32.mrf.mxu0
        %2100 = vmatprep.mubr.f32.mxu0 0.0
        %v2101 = vand.u32 %v224, 4294901760
        %2102 = vmatmul.mubr.f32.gmra.mxu0 %v2101
        %v2103 = vpop.f32.mrf.mxu0
        %v2104 = vadd.f32 %v1831, %v2103
        %v2105 = vpop.f32.mrf.mxu0
        %2106 = vmatprep.mubr.f32.mxu0 0.0
        %v2107 = vand.u32 %v225, 4294901760
        %2108 = vmatmul.mubr.f32.gmra.mxu0 %v2107
        %v2109 = vpop.f32.mrf.mxu0
        %v2110 = vadd.f32 %v1837, %v2109
        %v2111 = vpop.f32.mrf.mxu0
        %2112 = vmatprep.mubr.f32.mxu0 0.0
        %v2113 = vand.u32 %v226, 4294901760
        %2114 = vmatmul.mubr.f32.gmra.mxu0 %v2113
        %v2115 = vpop.f32.mrf.mxu0
        %v2116 = vadd.f32 %v1843, %v2115
        %v2117 = vpop.f32.mrf.mxu0
        %2118 = vmatprep.mubr.f32.mxu0 0.0
        %v2119 = vand.u32 %v227, 4294901760
        %2120 = vmatmul.mubr.f32.gmra.mxu0 %v2119
        %v2121 = vpop.f32.mrf.mxu0
        %v2122 = vadd.f32 %v1849, %v2121
        %v2123 = vpop.f32.mrf.mxu0
        %2124 = vmatprep.mubr.f32.mxu0 0.0
        %v2125 = vand.u32 %v228, 4294901760
        %2126 = vmatmul.mubr.f32.gmra.mxu0 %v2125
        %v2127 = vpop.f32.mrf.mxu0
        %v2128 = vadd.f32 %v1855, %v2127
        %v2129 = vpop.f32.mrf.mxu0
        %2130 = vmatprep.mubr.f32.mxu0 0.0
        %v2131 = vand.u32 %v229, 4294901760
        %2132 = vmatmul.mubr.f32.gmra.mxu0 %v2131
        %v2133 = vpop.f32.mrf.mxu0
        %v2134 = vadd.f32 %v1861, %v2133
        %v2135 = vpop.f32.mrf.mxu0
        %2136 = vmatprep.mubr.f32.mxu0 0.0
        %v2137 = vand.u32 %v230, 4294901760
        %2138 = vmatmul.mubr.f32.gmra.mxu0 %v2137
        %v2139 = vpop.f32.mrf.mxu0
        %v2140 = vadd.f32 %v1867, %v2139
        %v2141 = vpop.f32.mrf.mxu0
        %2142 = vmatprep.mubr.f32.mxu0 0.0
        %v2143 = vand.u32 %v231, 4294901760
        %2144 = vmatmul.mubr.f32.gmra.mxu0 %v2143
        %v2145 = vpop.f32.mrf.mxu0
        %v2146 = vadd.f32 %v1873, %v2145
        %v2147 = vpop.f32.mrf.mxu0
        %2148 = vmatprep.mubr.f32.mxu0 0.0
        %v2149 = vand.u32 %v232, 4294901760
        %2150 = vmatmul.mubr.f32.gmra.mxu0 %v2149
        %v2151 = vpop.f32.mrf.mxu0
        %v2152 = vadd.f32 %v1879, %v2151
        %v2153 = vpop.f32.mrf.mxu0
        %2154 = vmatprep.mubr.f32.mxu0 0.0
        %v2155 = vand.u32 %v233, 4294901760
        %2156 = vmatmul.mubr.f32.gmra.mxu0 %v2155
        %v2157 = vpop.f32.mrf.mxu0
        %v2158 = vadd.f32 %v1885, %v2157
        %v2159 = vpop.f32.mrf.mxu0
        %2160 = vmatprep.mubr.f32.mxu0 0.0
        %v2161 = vand.u32 %v234, 4294901760
        %2162 = vmatmul.mubr.f32.gmra.mxu0 %v2161
        %v2163 = vpop.f32.mrf.mxu0
        %v2164 = vadd.f32 %v1891, %v2163
        %v2165 = vpop.f32.mrf.mxu0
        %2166 = vmatprep.mubr.f32.mxu0 0.0
        %v2167 = vand.u32 %v235, 4294901760
        %2168 = vmatmul.mubr.f32.gmra.mxu0 %v2167
        %v2169 = vpop.f32.mrf.mxu0
        %v2170 = vadd.f32 %v1897, %v2169
        %v2171 = vpop.f32.mrf.mxu0
        %2172 = vmatprep.mubr.f32.mxu0 0.0
        %v2173 = vand.u32 %v236, 4294901760
        %2174 = vmatmul.mubr.f32.gmra.mxu0 %v2173
        %v2175 = vpop.f32.mrf.mxu0
        %v2176 = vadd.f32 %v1903, %v2175
        %v2177 = vpop.f32.mrf.mxu0
        %2178 = vmatprep.mubr.f32.mxu0 0.0
        %v2179 = vand.u32 %v237, 4294901760
        %2180 = vmatmul.mubr.f32.gmra.mxu0 %v2179
        %v2181 = vpop.f32.mrf.mxu0
        %v2182 = vadd.f32 %v1909, %v2181
        %v2183 = vpop.f32.mrf.mxu0
        %2184 = vmatprep.mubr.f32.mxu0 0.0
        %v2185 = vand.u32 %v238, 4294901760
        %2186 = vmatmul.mubr.f32.gmra.mxu0 %v2185
        %v2187 = vpop.f32.mrf.mxu0
        %v2188 = vadd.f32 %v1915, %v2187
        %v2189 = vpop.f32.mrf.mxu0
        %2190 = vmatprep.mubr.f32.mxu0 0.0
        %v2191 = vand.u32 %v239, 4294901760
        %2192 = vmatmul.mubr.f32.gmra.mxu0 %v2191
        %v2193 = vpop.f32.mrf.mxu0
        %v2194 = vadd.f32 %v1921, %v2193
        %v2195 = vpop.f32.mrf.mxu0
        %2196 = vmatprep.mubr.f32.mxu0 0.0
        %v2197 = vand.u32 %v240, 4294901760
        %2198 = vmatmul.mubr.f32.gmra.mxu0 %v2197
        %v2199 = vpop.f32.mrf.mxu0
        %v2200 = vadd.f32 %v1927, %v2199
        %v2201 = vpop.f32.mrf.mxu0
        %2202 = vmatprep.mubr.f32.mxu0 0.0
        %v2203 = vand.u32 %v241, 4294901760
        %2204 = vmatmul.mubr.f32.gmra.mxu0 %v2203
        %v2205 = vpop.f32.mrf.mxu0
        %v2206 = vadd.f32 %v1933, %v2205
        %v2207 = vpop.f32.mrf.mxu0
        %2208 = vmatprep.mubr.f32.mxu0 0.0
        %v2209 = vand.u32 %v242, 4294901760
        %2210 = vmatmul.mubr.f32.gmra.mxu0 %v2209
        %v2211 = vpop.f32.mrf.mxu0
        %v2212 = vadd.f32 %v1939, %v2211
        %v2213 = vpop.f32.mrf.mxu0
        %2214 = vmatprep.mubr.f32.mxu0 0.0
        %v2215 = vand.u32 %v243, 4294901760
        %2216 = vmatmul.mubr.f32.gmra.mxu0 %v2215
        %v2217 = vpop.f32.mrf.mxu0
        %v2218 = vadd.f32 %v1945, %v2217
        %v2219 = vpop.f32.mrf.mxu0
        %2220 = vmatprep.mubr.f32.mxu0 0.0
        %v2221 = vand.u32 %v244, 4294901760
        %2222 = vmatmul.mubr.f32.gmra.mxu0 %v2221
        %v2223 = vpop.f32.mrf.mxu0
        %v2224 = vadd.f32 %v1951, %v2223
        %v2225 = vpop.f32.mrf.mxu0
        %2226 = vmatprep.mubr.f32.mxu0 0.0
        %v2227 = vand.u32 %v245, 4294901760
        %2228 = vmatmul.mubr.f32.gmra.mxu0 %v2227
        %v2229 = vpop.f32.mrf.mxu0
        %v2230 = vadd.f32 %v1957, %v2229
        %v2231 = vpop.f32.mrf.mxu0
        %2232 = vmatprep.mubr.f32.mxu0 0.0
        %v2233 = vand.u32 %v246, 4294901760
        %2234 = vmatmul.mubr.f32.gmra.mxu0 %v2233
        %v2235 = vpop.f32.mrf.mxu0
        %v2236 = vadd.f32 %v1963, %v2235
        %v2237 = vpop.f32.mrf.mxu0
        %2238 = vmatprep.mubr.f32.mxu0 0.0
        %v2239 = vand.u32 %v247, 4294901760
        %2240 = vmatmul.mubr.f32.gmra.mxu0 %v2239
        %v2241 = vpop.f32.mrf.mxu0
        %v2242 = vadd.f32 %v1969, %v2241
        %v2243 = vpop.f32.mrf.mxu0
        %2244 = vdwg.mxu0
        %vm2245 = vcmask 154624
        %2246 = vst.msk [vmem:[%s205] sm:$0xff] %vm2245, %v2056
        %2247 = vst.msk [vmem:[%s205 + $0x8] sm:$0xff] %vm2245, %v2062
        %2248 = vst.msk [vmem:[%s205 + $0x10] sm:$0xff] %vm2245, %v2068
        %2249 = vst.msk [vmem:[%s205 + $0x18] sm:$0xff] %vm2245, %v2074
        %2250 = vst.msk [vmem:[%s205 + $0x20] sm:$0xff] %vm2245, %v2080
        %2251 = vst.msk [vmem:[%s205 + $0x28] sm:$0xff] %vm2245, %v2086
        %2252 = vst.msk [vmem:[%s205 + $0x30] sm:$0xff] %vm2245, %v2092
        %2253 = vst.msk [vmem:[%s205 + $0x38] sm:$0xff] %vm2245, %v2098
        %2254 = vst.msk [vmem:[%s205 + $0x40] sm:$0xff] %vm2245, %v2104
        %2255 = vst.msk [vmem:[%s205 + $0x48] sm:$0xff] %vm2245, %v2110
        %2256 = vst.msk [vmem:[%s205 + $0x50] sm:$0xff] %vm2245, %v2116
        %2257 = vst.msk [vmem:[%s205 + $0x58] sm:$0xff] %vm2245, %v2122
        %2258 = vst.msk [vmem:[%s205 + $0x60] sm:$0xff] %vm2245, %v2128
        %2259 = vst.msk [vmem:[%s205 + $0x68] sm:$0xff] %vm2245, %v2134
        %2260 = vst.msk [vmem:[%s205 + $0x70] sm:$0xff] %vm2245, %v2140
        %2261 = vst.msk [vmem:[%s205 + $0x78] sm:$0xff] %vm2245, %v2146
        %2262 = vst.msk [vmem:[%s205 + $0x80] sm:$0xff] %vm2245, %v2152
        %2263 = vst.msk [vmem:[%s205 + $0x88] sm:$0xff] %vm2245, %v2158
        %2264 = vst.msk [vmem:[%s205 + $0x90] sm:$0xff] %vm2245, %v2164
        %2265 = vst.msk [vmem:[%s205 + $0x98] sm:$0xff] %vm2245, %v2170
        %2266 = vst.msk [vmem:[%s205 + $0xa0] sm:$0xff] %vm2245, %v2176
        %2267 = vst.msk [vmem:[%s205 + $0xa8] sm:$0xff] %vm2245, %v2182
        %2268 = vst.msk [vmem:[%s205 + $0xb0] sm:$0xff] %vm2245, %v2188
        %2269 = vst.msk [vmem:[%s205 + $0xb8] sm:$0xff] %vm2245, %v2194
        %2270 = vst.msk [vmem:[%s205 + $0xc0] sm:$0xff] %vm2245, %v2200
        %2271 = vst.msk [vmem:[%s205 + $0xc8] sm:$0xff] %vm2245, %v2206
        %2272 = vst.msk [vmem:[%s205 + $0xd0] sm:$0xff] %vm2245, %v2212
        %2273 = vst.msk [vmem:[%s205 + $0xd8] sm:$0xff] %vm2245, %v2218
        %2274 = vst.msk [vmem:[%s205 + $0xe0] sm:$0xff] %vm2245, %v2224
        %2275 = vst.msk [vmem:[%s205 + $0xe8] sm:$0xff] %vm2245, %v2230
        %2276 = vst.msk [vmem:[%s205 + $0xf0] sm:$0xff] %vm2245, %v2236
        %2277 = vst.msk [vmem:[%s205 + $0xf8] sm:$0xff] %vm2245, %v2242
        %s2278 = sand.u32 %s94, 1
        %s2279 = sand.u32 %s94, 1
        %s2280 = smul.addr %s2279, 256
        %s2281 = scalar_lea.vmem [#allocation6], %s2280
        // Predicated region
        $region41: #{tpu_custom_call.1} parent=31 // pred_check
          %p2282 = pneg %p104
        $region42: #{tpu_custom_call.1} parent=31 // pred_check_branch
          %2284 = sbr.rel (%p2282) target = $region44
        $region43: #{tpu_custom_call.1} parent=31 // pred_region
          %s2285 = smul.u32 32, %s18
          %s2286 = ssub.s32 250, %s2285
          %p2287 = scmp.lt.s32.totalorder %s2286, 32
          %s2288 = scalar_select %p2287, %s2286, 32
          %s2289 = smul.u32 128, %s2288
          %p2290 = scmp.ne.s32.totalorder 0, %s2289
          %s2291 = smul.addr %s2285, 8
          %s2292 = scalar_lea.vmem %s3, %s2291
          // Predicated region
          $region45: #{tpu_custom_call.1} parent=43 // pred_check
            %p2293 = pneg %p2290
          $region46: #{tpu_custom_call.1} parent=43 // pred_check_branch
            %2295 = sbr.rel (%p2293) target = $region48
          $region47: #{tpu_custom_call.1} parent=43 // pred_region
            // Predicated region
            $region49: #{tpu_custom_call.1} parent=47 // pred_check
              _
            $region50: #{tpu_custom_call.1} parent=47 // pred_check_branch
              %2297 = sbr.rel (0) target = $region52
            $region51: #{tpu_custom_call.1} parent=47 // pred_region
              // Predicated region
              $region71: #{tpu_custom_call.1} parent=51 // pred_check
                _
              $region72: #{tpu_custom_call.1} parent=51 // pred_check_branch
                %2409 = sbr.rel (0) target = $region74
              $region73: #{tpu_custom_call.1} parent=51 // pred_region
                %s2410 = sshrl.u32 %s2288, 5
                // While loop
                $region75: #{tpu_custom_call.1} parent=73 // loop_pre_header
                  _
                $region76: #{tpu_custom_call.1} parent=73 // loop_header
                  %s2412 = sphi 0, %s2414
                  %p2413 = scmp.ge.s32.totalorder %s2412, %s2410
                  %s2417 = sphi 0, %s2486
                  %s2418 = sphi %s2281, %s2489
                  %s2419 = sphi %s2292, %s2490
                $region77: #{tpu_custom_call.1} parent=73 // loop_header_branch
                  %2416 = sbr.rel (%p2413) target = $region81
                $region78: #{tpu_custom_call.1} parent=73 // loop_body
                  %v2420 = vld [vmem:[%s2418] sm:$0xff]
                  %2421 = vst [vmem:[%s2419] sm:$0xff] %v2420
                  %v2422 = vld [vmem:[%s2418 + $0x8] sm:$0xff]
                  %2423 = vst [vmem:[%s2419 + $0x8] sm:$0xff] %v2422
                  %v2424 = vld [vmem:[%s2418 + $0x10] sm:$0xff]
                  %2425 = vst [vmem:[%s2419 + $0x10] sm:$0xff] %v2424
                  %v2426 = vld [vmem:[%s2418 + $0x18] sm:$0xff]
                  %2427 = vst [vmem:[%s2419 + $0x18] sm:$0xff] %v2426
                  %v2428 = vld [vmem:[%s2418 + $0x20] sm:$0xff]
                  %2429 = vst [vmem:[%s2419 + $0x20] sm:$0xff] %v2428
                  %v2430 = vld [vmem:[%s2418 + $0x28] sm:$0xff]
                  %2431 = vst [vmem:[%s2419 + $0x28] sm:$0xff] %v2430
                  %v2432 = vld [vmem:[%s2418 + $0x30] sm:$0xff]
                  %2433 = vst [vmem:[%s2419 + $0x30] sm:$0xff] %v2432
                  %v2434 = vld [vmem:[%s2418 + $0x38] sm:$0xff]
                  %2435 = vst [vmem:[%s2419 + $0x38] sm:$0xff] %v2434
                  %v2436 = vld [vmem:[%s2418 + $0x40] sm:$0xff]
                  %2437 = vst [vmem:[%s2419 + $0x40] sm:$0xff] %v2436
                  %v2438 = vld [vmem:[%s2418 + $0x48] sm:$0xff]
                  %2439 = vst [vmem:[%s2419 + $0x48] sm:$0xff] %v2438
                  %v2440 = vld [vmem:[%s2418 + $0x50] sm:$0xff]
                  %2441 = vst [vmem:[%s2419 + $0x50] sm:$0xff] %v2440
                  %v2442 = vld [vmem:[%s2418 + $0x58] sm:$0xff]
                  %2443 = vst [vmem:[%s2419 + $0x58] sm:$0xff] %v2442
                  %v2444 = vld [vmem:[%s2418 + $0x60] sm:$0xff]
                  %2445 = vst [vmem:[%s2419 + $0x60] sm:$0xff] %v2444
                  %v2446 = vld [vmem:[%s2418 + $0x68] sm:$0xff]
                  %2447 = vst [vmem:[%s2419 + $0x68] sm:$0xff] %v2446
                  %v2448 = vld [vmem:[%s2418 + $0x70] sm:$0xff]
                  %2449 = vst [vmem:[%s2419 + $0x70] sm:$0xff] %v2448
                  %v2450 = vld [vmem:[%s2418 + $0x78] sm:$0xff]
                  %2451 = vst [vmem:[%s2419 + $0x78] sm:$0xff] %v2450
                  %v2452 = vld [vmem:[%s2418 + $0x80] sm:$0xff]
                  %2453 = vst [vmem:[%s2419 + $0x80] sm:$0xff] %v2452
                  %v2454 = vld [vmem:[%s2418 + $0x88] sm:$0xff]
                  %2455 = vst [vmem:[%s2419 + $0x88] sm:$0xff] %v2454
                  %v2456 = vld [vmem:[%s2418 + $0x90] sm:$0xff]
                  %2457 = vst [vmem:[%s2419 + $0x90] sm:$0xff] %v2456
                  %v2458 = vld [vmem:[%s2418 + $0x98] sm:$0xff]
                  %2459 = vst [vmem:[%s2419 + $0x98] sm:$0xff] %v2458
                  %v2460 = vld [vmem:[%s2418 + $0xa0] sm:$0xff]
                  %2461 = vst [vmem:[%s2419 + $0xa0] sm:$0xff] %v2460
                  %v2462 = vld [vmem:[%s2418 + $0xa8] sm:$0xff]
                  %2463 = vst [vmem:[%s2419 + $0xa8] sm:$0xff] %v2462
                  %v2464 = vld [vmem:[%s2418 + $0xb0] sm:$0xff]
                  %2465 = vst [vmem:[%s2419 + $0xb0] sm:$0xff] %v2464
                  %v2466 = vld [vmem:[%s2418 + $0xb8] sm:$0xff]
                  %2467 = vst [vmem:[%s2419 + $0xb8] sm:$0xff] %v2466
                  %v2468 = vld [vmem:[%s2418 + $0xc0] sm:$0xff]
                  %2469 = vst [vmem:[%s2419 + $0xc0] sm:$0xff] %v2468
                  %v2470 = vld [vmem:[%s2418 + $0xc8] sm:$0xff]
                  %2471 = vst [vmem:[%s2419 + $0xc8] sm:$0xff] %v2470
                  %v2472 = vld [vmem:[%s2418 + $0xd0] sm:$0xff]
                  %2473 = vst [vmem:[%s2419 + $0xd0] sm:$0xff] %v2472
                  %v2474 = vld [vmem:[%s2418 + $0xd8] sm:$0xff]
                  %2475 = vst [vmem:[%s2419 + $0xd8] sm:$0xff] %v2474
                  %v2476 = vld [vmem:[%s2418 + $0xe0] sm:$0xff]
                  %2477 = vst [vmem:[%s2419 + $0xe0] sm:$0xff] %v2476
                  %v2478 = vld [vmem:[%s2418 + $0xe8] sm:$0xff]
                  %2479 = vst [vmem:[%s2419 + $0xe8] sm:$0xff] %v2478
                  %v2480 = vld [vmem:[%s2418 + $0xf0] sm:$0xff]
                  %2481 = vst [vmem:[%s2419 + $0xf0] sm:$0xff] %v2480
                  %v2482 = vld [vmem:[%s2418 + $0xf8] sm:$0xff]
                  %2483 = vst [vmem:[%s2419 + $0xf8] sm:$0xff] %v2482
                  %s2484 = sadd.s32 1, %s2417
                  %p2485 = scmp.ge.s32.totalorder %s2484, %s2410
                  %s2486 = scalar_select %p2485, 0, %s2484
                  %s2487 = smul.u32 %s2486, 256
                  %s2488 = smul.u32 %s2486, 256
                  %s2489 = scalar_lea.vmem %s2281, %s2487 [#allocation6]
                  %s2490 = scalar_lea.vmem %s2292, %s2488
                $region79: #{tpu_custom_call.1} parent=73 // loop_footer
                  %s2414 = sadd.s32 %s2412, 1
                $region80: #{tpu_custom_call.1} parent=73 // loop_footer_branch
                  %2411 = sbr.rel target = $region76
                $region81: #{tpu_custom_call.1} parent=73 // loop_exit
                  _
                %s2491 = sshrl.u32 %s2288, 5
                %s2492 = sand.u32 %s2288, 31
                %s2493 = smul.u32 %s2491, 32
                %s2494 = smul.u32 8, %s2493
                %s2495 = scalar_lea.vmem %s2281, %s2494 [#allocation6]
                %s2496 = smul.u32 8, %s2493
                %s2497 = scalar_lea.vmem %s2292, %s2496
                // While loop
                $region82: #{tpu_custom_call.1} parent=73 // loop_pre_header
                  _
                $region83: #{tpu_custom_call.1} parent=73 // loop_header
                  %s2499 = sphi 0, %s2501
                  %p2500 = scmp.ge.s32.totalorder %s2499, %s2492
                  %s2504 = sphi 0, %s2511
                  %s2505 = sphi %s2495, %s2514
                  %s2506 = sphi %s2497, %s2515
                $region84: #{tpu_custom_call.1} parent=73 // loop_header_branch
                  %2503 = sbr.rel (%p2500) target = $region88
                $region85: #{tpu_custom_call.1} parent=73 // loop_body
                  %v2507 = vld [vmem:[%s2505] sm:$0xff]
                  %2508 = vst [vmem:[%s2506] sm:$0xff] %v2507
                  %s2509 = sadd.s32 1, %s2504
                  %p2510 = scmp.ge.s32.totalorder %s2509, %s2492
                  %s2511 = scalar_select %p2510, 0, %s2509
                  %s2512 = smul.u32 %s2511, 8
                  %s2513 = smul.u32 %s2511, 8
                  %s2514 = scalar_lea.vmem %s2495, %s2512 [#allocation6]
                  %s2515 = scalar_lea.vmem %s2497, %s2513
                $region86: #{tpu_custom_call.1} parent=73 // loop_footer
                  %s2501 = sadd.s32 %s2499, 1
                $region87: #{tpu_custom_call.1} parent=73 // loop_footer_branch
                  %2498 = sbr.rel target = $region83
                $region88: #{tpu_custom_call.1} parent=73 // loop_exit
                  _
              $region74: #{tpu_custom_call.1} parent=51 // pred_fallthru
                _
              // Predicated region
              $region89: #{tpu_custom_call.1} parent=51 // pred_check
                _
              $region90: #{tpu_custom_call.1} parent=51 // pred_check_branch
                %2517 = sbr.rel target = $region92
              $region91: #{tpu_custom_call.1} parent=51 // pred_region
                _
              $region92: #{tpu_custom_call.1} parent=51 // pred_fallthru
                _
            $region52: #{tpu_custom_call.1} parent=47 // pred_fallthru
              _
            // Predicated region
            $region53: #{tpu_custom_call.1} parent=47 // pred_check
              _
            $region54: #{tpu_custom_call.1} parent=47 // pred_check_branch
              %2299 = sbr.rel target = $region56
            $region55: #{tpu_custom_call.1} parent=47 // pred_region
              %s2301 = ssub.s32 256, 1
              %s2302 = sshrl.u32 %s2288, 5
              // While loop
              $region57: #{tpu_custom_call.1} parent=55 // loop_pre_header
                _
              $region58: #{tpu_custom_call.1} parent=55 // loop_header
                %s2304 = sphi 0, %s2306
                %p2305 = scmp.ge.s32.totalorder %s2304, %s2302
                %s2309 = sphi 0, %s2378
                %s2310 = sphi %s2281, %s2381
                %s2311 = sphi %s2292, %s2382
              $region59: #{tpu_custom_call.1} parent=55 // loop_header_branch
                %2308 = sbr.rel (%p2305) target = $region63
              $region60: #{tpu_custom_call.1} parent=55 // loop_body
                %v2312 = vld [vmem:[%s2310] sm:%s2301]
                %2313 = vst [vmem:[%s2311] sm:%s2301] %v2312
                %v2314 = vld [vmem:[%s2310 + $0x8] sm:%s2301]
                %2315 = vst [vmem:[%s2311 + $0x8] sm:%s2301] %v2314
                %v2316 = vld [vmem:[%s2310 + $0x10] sm:%s2301]
                %2317 = vst [vmem:[%s2311 + $0x10] sm:%s2301] %v2316
                %v2318 = vld [vmem:[%s2310 + $0x18] sm:%s2301]
                %2319 = vst [vmem:[%s2311 + $0x18] sm:%s2301] %v2318
                %v2320 = vld [vmem:[%s2310 + $0x20] sm:%s2301]
                %2321 = vst [vmem:[%s2311 + $0x20] sm:%s2301] %v2320
                %v2322 = vld [vmem:[%s2310 + $0x28] sm:%s2301]
                %2323 = vst [vmem:[%s2311 + $0x28] sm:%s2301] %v2322
                %v2324 = vld [vmem:[%s2310 + $0x30] sm:%s2301]
                %2325 = vst [vmem:[%s2311 + $0x30] sm:%s2301] %v2324
                %v2326 = vld [vmem:[%s2310 + $0x38] sm:%s2301]
                %2327 = vst [vmem:[%s2311 + $0x38] sm:%s2301] %v2326
                %v2328 = vld [vmem:[%s2310 + $0x40] sm:%s2301]
                %2329 = vst [vmem:[%s2311 + $0x40] sm:%s2301] %v2328
                %v2330 = vld [vmem:[%s2310 + $0x48] sm:%s2301]
                %2331 = vst [vmem:[%s2311 + $0x48] sm:%s2301] %v2330
                %v2332 = vld [vmem:[%s2310 + $0x50] sm:%s2301]
                %2333 = vst [vmem:[%s2311 + $0x50] sm:%s2301] %v2332
                %v2334 = vld [vmem:[%s2310 + $0x58] sm:%s2301]
                %2335 = vst [vmem:[%s2311 + $0x58] sm:%s2301] %v2334
                %v2336 = vld [vmem:[%s2310 + $0x60] sm:%s2301]
                %2337 = vst [vmem:[%s2311 + $0x60] sm:%s2301] %v2336
                %v2338 = vld [vmem:[%s2310 + $0x68] sm:%s2301]
                %2339 = vst [vmem:[%s2311 + $0x68] sm:%s2301] %v2338
                %v2340 = vld [vmem:[%s2310 + $0x70] sm:%s2301]
                %2341 = vst [vmem:[%s2311 + $0x70] sm:%s2301] %v2340
                %v2342 = vld [vmem:[%s2310 + $0x78] sm:%s2301]
                %2343 = vst [vmem:[%s2311 + $0x78] sm:%s2301] %v2342
                %v2344 = vld [vmem:[%s2310 + $0x80] sm:%s2301]
                %2345 = vst [vmem:[%s2311 + $0x80] sm:%s2301] %v2344
                %v2346 = vld [vmem:[%s2310 + $0x88] sm:%s2301]
                %2347 = vst [vmem:[%s2311 + $0x88] sm:%s2301] %v2346
                %v2348 = vld [vmem:[%s2310 + $0x90] sm:%s2301]
                %2349 = vst [vmem:[%s2311 + $0x90] sm:%s2301] %v2348
                %v2350 = vld [vmem:[%s2310 + $0x98] sm:%s2301]
                %2351 = vst [vmem:[%s2311 + $0x98] sm:%s2301] %v2350
                %v2352 = vld [vmem:[%s2310 + $0xa0] sm:%s2301]
                %2353 = vst [vmem:[%s2311 + $0xa0] sm:%s2301] %v2352
                %v2354 = vld [vmem:[%s2310 + $0xa8] sm:%s2301]
                %2355 = vst [vmem:[%s2311 + $0xa8] sm:%s2301] %v2354
                %v2356 = vld [vmem:[%s2310 + $0xb0] sm:%s2301]
                %2357 = vst [vmem:[%s2311 + $0xb0] sm:%s2301] %v2356
                %v2358 = vld [vmem:[%s2310 + $0xb8] sm:%s2301]
                %2359 = vst [vmem:[%s2311 + $0xb8] sm:%s2301] %v2358
                %v2360 = vld [vmem:[%s2310 + $0xc0] sm:%s2301]
                %2361 = vst [vmem:[%s2311 + $0xc0] sm:%s2301] %v2360
                %v2362 = vld [vmem:[%s2310 + $0xc8] sm:%s2301]
                %2363 = vst [vmem:[%s2311 + $0xc8] sm:%s2301] %v2362
                %v2364 = vld [vmem:[%s2310 + $0xd0] sm:%s2301]
                %2365 = vst [vmem:[%s2311 + $0xd0] sm:%s2301] %v2364
                %v2366 = vld [vmem:[%s2310 + $0xd8] sm:%s2301]
                %2367 = vst [vmem:[%s2311 + $0xd8] sm:%s2301] %v2366
                %v2368 = vld [vmem:[%s2310 + $0xe0] sm:%s2301]
                %2369 = vst [vmem:[%s2311 + $0xe0] sm:%s2301] %v2368
                %v2370 = vld [vmem:[%s2310 + $0xe8] sm:%s2301]
                %2371 = vst [vmem:[%s2311 + $0xe8] sm:%s2301] %v2370
                %v2372 = vld [vmem:[%s2310 + $0xf0] sm:%s2301]
                %2373 = vst [vmem:[%s2311 + $0xf0] sm:%s2301] %v2372
                %v2374 = vld [vmem:[%s2310 + $0xf8] sm:%s2301]
                %2375 = vst [vmem:[%s2311 + $0xf8] sm:%s2301] %v2374
                %s2376 = sadd.s32 1, %s2309
                %p2377 = scmp.ge.s32.totalorder %s2376, %s2302
                %s2378 = scalar_select %p2377, 0, %s2376
                %s2379 = smul.u32 %s2378, 256
                %s2380 = smul.u32 %s2378, 256
                %s2381 = scalar_lea.vmem %s2281, %s2379 [#allocation6]
                %s2382 = scalar_lea.vmem %s2292, %s2380
              $region61: #{tpu_custom_call.1} parent=55 // loop_footer
                %s2306 = sadd.s32 %s2304, 1
              $region62: #{tpu_custom_call.1} parent=55 // loop_footer_branch
                %2303 = sbr.rel target = $region58
              $region63: #{tpu_custom_call.1} parent=55 // loop_exit
                _
              %s2383 = sshrl.u32 %s2288, 5
              %s2384 = sand.u32 %s2288, 31
              %s2385 = smul.u32 %s2383, 32
              %s2386 = smul.u32 8, %s2385
              %s2387 = scalar_lea.vmem %s2281, %s2386 [#allocation6]
              %s2388 = smul.u32 8, %s2385
              %s2389 = scalar_lea.vmem %s2292, %s2388
              // While loop
              $region64: #{tpu_custom_call.1} parent=55 // loop_pre_header
                _
              $region65: #{tpu_custom_call.1} parent=55 // loop_header
                %s2391 = sphi 0, %s2393
                %p2392 = scmp.ge.s32.totalorder %s2391, %s2384
                %s2396 = sphi 0, %s2403
                %s2397 = sphi %s2387, %s2406
                %s2398 = sphi %s2389, %s2407
              $region66: #{tpu_custom_call.1} parent=55 // loop_header_branch
                %2395 = sbr.rel (%p2392) target = $region70
              $region67: #{tpu_custom_call.1} parent=55 // loop_body
                %v2399 = vld [vmem:[%s2397] sm:%s2301]
                %2400 = vst [vmem:[%s2398] sm:%s2301] %v2399
                %s2401 = sadd.s32 1, %s2396
                %p2402 = scmp.ge.s32.totalorder %s2401, %s2384
                %s2403 = scalar_select %p2402, 0, %s2401
                %s2404 = smul.u32 %s2403, 8
                %s2405 = smul.u32 %s2403, 8
                %s2406 = scalar_lea.vmem %s2387, %s2404 [#allocation6]
                %s2407 = scalar_lea.vmem %s2389, %s2405
              $region68: #{tpu_custom_call.1} parent=55 // loop_footer
                %s2393 = sadd.s32 %s2391, 1
              $region69: #{tpu_custom_call.1} parent=55 // loop_footer_branch
                %2390 = sbr.rel target = $region65
              $region70: #{tpu_custom_call.1} parent=55 // loop_exit
                _
            $region56: #{tpu_custom_call.1} parent=47 // pred_fallthru
              _
          $region48: #{tpu_custom_call.1} parent=43 // pred_fallthru
            _
          %2518 = vnop
        $region44: #{tpu_custom_call.1} parent=31 // pred_fallthru
          _
      $region32: #{tpu_custom_call.1} parent=5 // pred_fallthru
        _
      %p2519 = scmp.le.s32.totalorder 2, %s13
      // Predicated region
      $region93: #{tpu_custom_call.1} parent=5 // pred_check
        %p2520 = pneg %p2519
      $region94: #{tpu_custom_call.1} parent=5 // pred_check_branch
        %2522 = sbr.rel (%p2520) target = $region96
      $region95: #{tpu_custom_call.1} parent=5 // pred_region
        %s2523 = ssub.s32 %s13, 2
        // Predicated region
        $region97: #{tpu_custom_call.1} parent=95 // pred_check
          %p2524 = pneg %p110
        $region98: #{tpu_custom_call.1} parent=95 // pred_check_branch
          %2526 = sbr.rel (%p2524) target = $region100
        $region99: #{tpu_custom_call.1} parent=95 // pred_region
          %s2527 = sand.u32 %s95, 1
          %s2528 = sand.u32 %s95, 1
          %s2529 = smul.addr %s2528, 256
          %s2530 = scalar_lea.vmem [#allocation6], %s2529
        $region100: #{tpu_custom_call.1} parent=95 // pred_fallthru
          _
      $region96: #{tpu_custom_call.1} parent=5 // pred_fallthru
        _
    $region6: #{tpu_custom_call.1} parent=1 // loop_footer
      %s17 = sadd.s32 1, %s13
    $region7: #{tpu_custom_call.1} parent=1 // loop_footer_branch
      %12 = sbr.rel target = $region3
    $region8: #{tpu_custom_call.1} parent=1 // loop_exit
      _
    %2531 = vsyncpa [#allocation3], 1
    %s2532 = scalar_lea.sflag [#allocation3], 1
    %2533 = vsyncpa %s2532, 1
    %2534 = vsyncpa [#allocation5], 1

</llo_original>
